<compile_context>
chip_gen: v5e
topology: v5e:2x2
jax: 0.10.0
libtpu: 0.0.40
codegen_flags: <defaults>
</compile_context>

<pallas_src>
import functools
import math

import jax
import jax.numpy as jnp
from jax.experimental import pallas as pl
from jax.experimental.pallas import tpu as pltpu

BN_EPS = 1e-5            # nn.BatchNorm2d default eps used in SpatialAttention2d
GEM_P = 3.0              # GeneralizedMeanPoolingP(norm=3.0)
GEM_EPS = 1e-6           # GeM clamp epsilon
ARC_SCALE = 128.0        # Arcface scale
NORM_EPS = 1e-12         # torch F.normalize default eps
SOFTPLUS_THRESHOLD = 20.0

MXU_DTYPE = jnp.bfloat16                 # MXU operand dtype (f32 accumulation)
VMEM_LIMIT_FALLBACK = 32 * 1024 * 1024   # used if the hardware query fails


def _vmem_limit_bytes():
    """Generation-aware scoped-VMEM budget (v5e/v6e: 128 MiB, v7x: 64 MiB)."""
    try:
        info = pltpu.get_tpu_info()
        cap = getattr(info, "vmem_capacity_bytes", None)
        if cap is None:
            return VMEM_LIMIT_FALLBACK
        if cap >= 96 * 1024 * 1024:      # v5e / v6e class parts
            return 80 * 1024 * 1024
        return 40 * 1024 * 1024          # v7x class parts
    except Exception:
        return VMEM_LIMIT_FALLBACK


# --------------------------------------------------------------------------
# Kernel 1: GeM pooling (p = 3) over f4, tiled spatial axis, + fc_t linear
# --------------------------------------------------------------------------
def _gem_fc_kernel(f4_ref, wt_ref, bt_ref, fg_ref, acc_ref, *, hw_total):
    """Grid = (B, HW4 // T4).  acc_ref: (1, C4) f32 resident accumulator."""
    t = pl.program_id(1)

    @pl.when(t == 0)
    def _():
        acc_ref[...] = jnp.zeros_like(acc_ref)

    x = f4_ref[...].astype(jnp.float32)              # (T4, C4), streamed as bf16
    xc = jnp.maximum(x, GEM_EPS)                     # clamp(min=eps)
    acc_ref[...] += jnp.sum(xc * xc * xc, axis=0, keepdims=True)

    @pl.when(t == pl.num_programs(1) - 1)
    def _():
        m = acc_ref[...] * (1.0 / hw_total)                       # mean, > 0
        gem = jnp.exp(jnp.log(m) * (1.0 / GEM_P))                 # m ** (1/p)
        fg_ref[...] = jnp.dot(gem.astype(wt_ref.dtype), wt_ref[...],
                              preferred_element_type=jnp.float32) + bt_ref[...]


# --------------------------------------------------------------------------
# Kernel 2: SpatialAttention2d fused with orthogonal fusion + spatial pooling
# --------------------------------------------------------------------------
def _local_orth_kernel(x_ref, w1_ref, pp_ref, fg_ref, fo_ref, *, hw_total):
    """Grid = (B, S_split, HW3 // T // S_split).

    x_ref : (T, C3) spatial tile of f3 (MXU dtype)
    w1_ref: (C3, C3) conv1 weight with eval-mode BN folded in (MXU dtype)
    pp_ref: (3, C3) packed f32 params: [folded conv1 bias; conv2 weight; conv2 bias]
    fg_ref: (1, C3) global descriptor for this batch element (f32)
    fo_ref: (1, C3) running sum of fl over this split's spatial tiles; the
            orthogonal projection (linear) and /HW are applied only in the
            finalize block, so the hot loop only accumulates S = sum(fl).
    """
    t = pl.program_id(2)

    @pl.when(t == 0)
    def _():
        fo_ref[...] = jnp.zeros_like(fo_ref)

    x = x_ref[...]                       # (T, C3)
    w1 = w1_ref[...]                     # (C3, C3)
    pp = pp_ref[...]                     # (3, C3) f32

    # conv1 (1x1) + folded BatchNorm (eval mode).
    # TODO(synk): training-mode batch statistics are not reproduced (eval only).
    y = jnp.dot(x, w1, preferred_element_type=jnp.float32) + pp[0:1, :]

    # F.normalize(p=2, dim=channel)  ==  y / max(||y||, eps)
    inv_n = jax.lax.rsqrt(jnp.maximum(jnp.sum(y * y, axis=-1, keepdims=True),
                                      NORM_EPS * NORM_EPS))
    fnorm = y * inv_n

    # ReLU -> conv2 (1x1, out_channels=1) -> softplus(beta=1, threshold=20)
    z = jnp.maximum(y, 0.0)
    a = jnp.sum(z * pp[1:2, :], axis=-1, keepdims=True) + pp[2:3, 0:1]   # (T, 1)
    att = jnp.where(a > SOFTPLUS_THRESHOLD, a,
                    jnp.log(1.0 + jnp.exp(jnp.minimum(a, SOFTPLUS_THRESHOLD))))
    fl = att * fnorm                                                     # (T, C3)

    # Only the linear partial sum is accumulated per tile.
    fo_ref[...] += jnp.sum(fl, axis=0, keepdims=True)

    @pl.when(t == pl.num_programs(2) - 1)
    def _():
        s = fo_ref[...]                                  # (1, C3) = sum(fl)
        fg = fg_ref[...]                                 # (1, C3)
        coef = jnp.sum(s * fg, axis=-1, keepdims=True)   # (1, 1)
        fg_sq = jnp.maximum(jnp.sum(fg * fg, axis=-1, keepdims=True), NORM_EPS)
        fo_ref[...] = (s - coef * (fg / fg_sq)) * (1.0 / hw_total)


# --------------------------------------------------------------------------
# Kernel 3: global_feature = fc(cat(fg, fo)); fused with Arcface feature
#           L2-normalization (done once, not once per class tile)
# --------------------------------------------------------------------------
def _fc_norm_kernel(fg_ref, fo_ref, wg_ref, wo_ref, bfc_ref, feat_ref, featn_ref):
    wg = wg_ref[...]
    wo = wo_ref[...]
    feat = (
        jnp.dot(fg_ref[...].astype(wg.dtype), wg, preferred_element_type=jnp.float32)
        + jnp.dot(fo_ref[...].astype(wo.dtype), wo, preferred_element_type=jnp.float32)
        + bfc_ref[...])
    feat_ref[...] = feat
    inv_n = jax.lax.rsqrt(jnp.maximum(jnp.sum(feat * feat, axis=-1, keepdims=True),
                                      NORM_EPS * NORM_EPS))
    featn_ref[...] = (feat * inv_n).astype(featn_ref.dtype)


# --------------------------------------------------------------------------
# Kernel 4: Arcface cosine logits (targets=None), tiled over class columns
# --------------------------------------------------------------------------
def _arc_kernel(featn_ref, wn_ref, logit_ref):
    cos = jnp.clip(jnp.dot(featn_ref[...], wn_ref[...],
                           preferred_element_type=jnp.float32), -1.0, 1.0)
    logit_ref[...] = cos * ARC_SCALE
    # TODO(synk): Arcface margin branch (targets != None: hard-example update,
    # scatter of the margin-adjusted target logit, running buffer `t`) is not
    # implemented; inference path only.


# --------------------------------------------------------------------------
# Glue: synthetic backbone + parameter init / prep + wrappers
# --------------------------------------------------------------------------
def synthetic_backbone(x, wb3, wb4):
    # TODO(synk): DOLG takes an external CNN backbone (e.g. ResNet); this is a
    # deterministic avg-pool + 1x1-projection stand-in.  It emits channels-last
    # (B, H*W, C) directly so no extra transpose pass over f3/f4 is needed.
    B, C, H, W = x.shape
    x3 = x.reshape(B, C, H // 2, 2, W // 2, 2).mean(axis=(3, 5))   # stride-2 pool
    x4 = x.reshape(B, C, H // 4, 4, W // 4, 4).mean(axis=(3, 5))   # stride-4 pool
    f3 = jnp.einsum('bchw,oc->bhwo', x3, wb3).reshape(B, (H // 2) * (W // 2), -1)
    f4 = jnp.einsum('bchw,oc->bhwo', x4, wb4).reshape(B, (H // 4) * (W // 4), -1)
    return f3, f4


def init_params(key, in_ch, s3, s4, head, ncls):
    ks = jax.random.split(key, 16)
    p = {}
    p['wb3'] = 0.1 * jax.random.normal(ks[0], (s3, in_ch), jnp.float32)
    p['wb4'] = 0.1 * jax.random.normal(ks[1], (s4, in_ch), jnp.float32)
    # SpatialAttention2d
    p['conv1_w'] = jax.random.normal(ks[2], (s3, s3), jnp.float32) / math.sqrt(s3)
    p['conv1_b'] = 0.01 * jax.random.normal(ks[3], (s3,), jnp.float32)
    p['bn_gamma'] = 1.0 + 0.1 * jax.random.normal(ks[4], (s3,), jnp.float32)
    p['bn_beta'] = 0.1 * jax.random.normal(ks[5], (s3,), jnp.float32)
    p['bn_mean'] = 0.1 * jax.random.normal(ks[6], (s3,), jnp.float32)
    p['bn_var'] = 1.0 + 0.1 * jax.random.uniform(ks[7], (s3,), jnp.float32)
    p['conv2_w'] = jax.random.normal(ks[8], (1, s3), jnp.float32) / math.sqrt(s3)
    p['conv2_b'] = jnp.zeros((1,), jnp.float32)
    # fc_t : s4 -> s3
    p['fct_w'] = jax.random.normal(ks[9], (s3, s4), jnp.float32) / math.sqrt(s4)
    p['fct_b'] = 0.01 * jax.random.normal(ks[10], (s3,), jnp.float32)
    # fc : 2*s3 -> head
    p['fc_w'] = jax.random.normal(ks[11], (head, 2 * s3), jnp.float32) / math.sqrt(2 * s3)
    p['fc_b'] = 0.01 * jax.random.normal(ks[12], (head,), jnp.float32)
    # Arcface weight : (num_classes, head)
    p['arc_w'] = 0.05 * jax.random.normal(ks[13], (ncls, head), jnp.float32)
    return p


def prepare_params(p):
    """Kernel-layout parameters: fold eval-mode BN into conv1, transpose weights
    for row-major (rows, C) @ (C, out) matmuls, pre-normalize the Arcface weight
    (input-independent), pack per-channel vectors into one tile, and cast MXU
    operands to MXU_DTYPE (bf16 by default)."""
    C3 = p['conv1_w'].shape[0]
    scale = p['bn_gamma'] * jax.lax.rsqrt(p['bn_var'] + BN_EPS)
    w1f = (p['conv1_w'].T * scale[None, :]).astype(MXU_DTYPE)            # (C3, C3)
    b1f = (p['conv1_b'] - p['bn_mean']) * scale + p['bn_beta']           # (C3,)
    # packed per-channel params for the local kernel (single (3, C3) DMA):
    #   row 0 = folded conv1 bias, row 1 = conv2 weight, row 2 = conv2 bias.
    pp = jnp.stack([b1f, p['conv2_w'][0],
                    jnp.full((C3,), p['conv2_b'][0], jnp.float32)], axis=0)
    inv_wn = jax.lax.rsqrt(jnp.maximum(
        jnp.sum(p['arc_w'] ** 2, axis=1, keepdims=True), NORM_EPS * NORM_EPS))
    return {
        'w1f': w1f,
        'pp': pp.astype(jnp.float32),
        'wt_t': p['fct_w'].T.astype(MXU_DTYPE),                          # (C4, C3)
        'bt': p['fct_b'].reshape(1, C3).astype(jnp.float32),
        'wg_t': p['fc_w'][:, :C3].T.astype(MXU_DTYPE),                   # (C3, HEAD)
        'wo_t': p['fc_w'][:, C3:].T.astype(MXU_DTYPE),                   # (C3, HEAD)
        'bfc': p['fc_b'].reshape(1, -1).astype(jnp.float32),
        'wn_t': (p['arc_w'] * inv_wn).T.astype(MXU_DTYPE),               # (HEAD, NCLS)
    }


def _pick_tile(total, cap, quantum):
    """Largest multiple of `quantum` that divides `total` and is <= cap;
    falls back to the full extent if no such divisor exists."""
    t = min(total, cap)
    t -= t % quantum
    while t >= quantum:
        if total % t == 0:
            return t
        t -= quantum
    return total


def dolg_forward(x, p, *, spatial_tile=None, gem_tile=None, cls_tile=None,
                 spatial_split=None):
    """DOLG forward (targets=None). Returns (global_feature, global_logits)."""
    kp = prepare_params(p)
    f3_cl, f4_cl = synthetic_backbone(x, p['wb3'], p['wb4'])       # (B, HW, C)
    B, HW3, C3 = f3_cl.shape
    _, HW4, C4 = f4_cl.shape
    HEAD = p['fc_w'].shape[0]
    NCLS = p['arc_w'].shape[0]

    vmem_limit = _vmem_limit_bytes()
    bpe = 2 if MXU_DTYPE == jnp.bfloat16 else 4

    # bf16 activations for the streaming MXU / GeM reads (halves HBM traffic).
    f3_q = f3_cl.astype(MXU_DTYPE)
    f4_q = f4_cl.astype(MXU_DTYPE)

    if spatial_tile is None:
        # Budget the double-buffered input tile against the scoped-VMEM limit,
        # aligned to MXU granularity where the spatial extent allows it.
        cap = max(128, min(2048, (vmem_limit // 6) // max(1, 2 * C3 * bpe)))
        quantum = 256 if HW3 % 256 == 0 else (128 if HW3 % 128 == 0 else 8)
        spatial_tile = _pick_tile(HW3, cap, quantum)
    if gem_tile is None:
        cap = max(128, min(2048, (vmem_limit // 6) // max(1, 2 * C4 * bpe)))
        gem_tile = _pick_tile(HW4, cap, 8)
    if cls_tile is None:
        # Wide, lane-dense class tiles: the Arcface kernel is a pure HBM read.
        cls_tile = min(4096, ((NCLS + 127) // 128) * 128)
    assert HW3 % spatial_tile == 0 and HW4 % gem_tile == 0

    num_tiles = HW3 // spatial_tile
    if spatial_split is None:
        # Give the v7x megacore something to split when the batch is tiny.
        spatial_split = 2 if (B == 1 and num_tiles % 2 == 0) else 1
    assert num_tiles % spatial_split == 0
    tps = num_tiles // spatial_split

    # --- global branch: fg = fc_t(GeM_p3(f4)), tiled spatial accumulation -----
    fg3 = pl.pallas_call(
        functools.partial(_gem_fc_kernel, hw_total=float(HW4)),
        out_shape=jax.ShapeDtypeStruct((B, 1, C3), jnp.float32),
        grid=(B, HW4 // gem_tile),
        in_specs=[
            pl.BlockSpec((None, gem_tile, C4), lambda b, t: (b, t, 0)),
            pl.BlockSpec((C4, C3), lambda b, t: (0, 0)),
            pl.BlockSpec((1, C3), lambda b, t: (0, 0)),
        ],
        out_specs=pl.BlockSpec((None, 1, C3), lambda b, t: (b, 0, 0)),
        scratch_shapes=[pltpu.VMEM((1, C4), jnp.float32)],
        compiler_params=pltpu.CompilerParams(
            dimension_semantics=("parallel", "arbitrary"),
            vmem_limit_bytes=vmem_limit),
    )(f4_q, kp['wt_t'], kp['bt'])

    # --- local branch fused with orthogonal fusion + spatial pooling ----------
    fo4 = pl.pallas_call(
        functools.partial(_local_orth_kernel, hw_total=float(HW3)),
        out_shape=jax.ShapeDtypeStruct((B, spatial_split, 1, C3), jnp.float32),
        grid=(B, spatial_split, tps),
        in_specs=[
            pl.BlockSpec((None, spatial_tile, C3),
                         lambda b, s, t: (b, s * tps + t, 0)),
            pl.BlockSpec((C3, C3), lambda b, s, t: (0, 0)),
            pl.BlockSpec((3, C3), lambda b, s, t: (0, 0)),
            pl.BlockSpec((None, 1, C3), lambda b, s, t: (b, 0, 0)),
        ],
        out_specs=pl.BlockSpec((None, None, 1, C3), lambda b, s, t: (b, s, 0, 0)),
        compiler_params=pltpu.CompilerParams(
            dimension_semantics=("parallel", "parallel", "arbitrary"),
            vmem_limit_bytes=vmem_limit),
    )(f3_q, kp['w1f'], kp['pp'], fg3)

    fg = fg3.reshape(B, C3)
    # Projection is linear, so summing the per-split projected means is exact.
    fo = jnp.sum(fo4, axis=(1, 2))

    # --- head fc + Arcface feature normalization (once) ------------------------
    feat, featn = pl.pallas_call(
        _fc_norm_kernel,
        out_shape=(jax.ShapeDtypeStruct((B, HEAD), jnp.float32),
                   jax.ShapeDtypeStruct((B, HEAD), MXU_DTYPE)),
    )(fg, fo, kp['wg_t'], kp['wo_t'], kp['bfc'])

    # --- Arcface cosine logits, tiled over (padded) class columns --------------
    ncls_pad = ((NCLS + cls_tile - 1) // cls_tile) * cls_tile
    wn = kp['wn_t']
    if ncls_pad != NCLS:
        wn = jnp.pad(wn, ((0, 0), (0, ncls_pad - NCLS)))   # zero cols -> 0 logits
    logits_pad = pl.pallas_call(
        _arc_kernel,
        out_shape=jax.ShapeDtypeStruct((B, ncls_pad), jnp.float32),
        grid=(ncls_pad // cls_tile,),
        in_specs=[
            pl.BlockSpec((B, HEAD), lambda j: (0, 0)),
            pl.BlockSpec((HEAD, cls_tile), lambda j: (0, j)),
        ],
        out_specs=pl.BlockSpec((B, cls_tile), lambda j: (0, j)),
        compiler_params=pltpu.CompilerParams(
            dimension_semantics=("parallel",),
            vmem_limit_bytes=vmem_limit),
    )(featn, wn)
    logits = logits_pad[:, :NCLS]

    return feat, logits


# --------------------------------------------------------------------------
# Pure-JAX reference.  Mirrors the kernels' precision policy (folded BN, bf16
# MXU / streaming operands, f32 accumulation) so the comparison isolates the
# Pallas tiling / fusion / indexing, not the (intentional) precision trade-off.
# Kept in the PyTorch per-position projection form (the kernel hoists the
# linear projection; they are mathematically identical).
# --------------------------------------------------------------------------
def reference_forward(x, p):
    kp = prepare_params(p)
    f3_cl, f4_cl = synthetic_backbone(x, p['wb3'], p['wb4'])
    # local branch (SpatialAttention2d, eval-mode BN folded into conv1)
    y = jnp.einsum('bpc,cd->bpd', f3_cl.astype(MXU_DTYPE), kp['w1f'],
                   preferred_element_type=jnp.float32) + kp['pp'][0][None, None, :]
    inv_n = jax.lax.rsqrt(jnp.maximum(jnp.sum(y * y, -1, keepdims=True),
                                      NORM_EPS * NORM_EPS))
    fnorm = y * inv_n
    z = jnp.maximum(y, 0.0)
    a = jnp.sum(z * kp['pp'][1][None, None, :], -1, keepdims=True) + kp['pp'][2, 0]
    att = jnp.where(a > SOFTPLUS_THRESHOLD, a,
                    jnp.log(1.0 + jnp.exp(jnp.minimum(a, SOFTPLUS_THRESHOLD))))
    fl = att * fnorm
    # global branch: GeM(p=3) + fc_t   (f4 streamed as bf16, math in f32)
    f4_q = f4_cl.astype(MXU_DTYPE).astype(jnp.float32)
    xc = jnp.maximum(f4_q, GEM_EPS)
    m = jnp.mean(xc * xc * xc, axis=1)
    gem = jnp.exp(jnp.log(m) * (1.0 / GEM_P))
    fg = jnp.dot(gem.astype(MXU_DTYPE), kp['wt_t'],
                 preferred_element_type=jnp.float32) + kp['bt']
    # orthogonal fusion + global average pool
    coef = jnp.sum(fl * fg[:, None, :], -1, keepdims=True)
    fg_sq = jnp.maximum(jnp.sum(fg * fg, -1), NORM_EPS)[:, None, None]
    fo = jnp.mean(fl - coef * fg[:, None, :] / fg_sq, axis=1)
    # head fc + Arcface (targets=None)
    feat = (jnp.dot(fg.astype(MXU_DTYPE), kp['wg_t'], preferred_element_type=jnp.float32)
            + jnp.dot(fo.astype(MXU_DTYPE), kp['wo_t'], preferred_element_type=jnp.float32)
            + kp['bfc'])
    inv_f = jax.lax.rsqrt(jnp.maximum(jnp.sum(feat * feat, -1, keepdims=True),
                                      NORM_EPS * NORM_EPS))
    logits = jnp.clip(jnp.dot((feat * inv_f).astype(MXU_DTYPE), kp['wn_t'],
                              preferred_element_type=jnp.float32),
                      -1.0, 1.0) * ARC_SCALE
    return feat, logits


if __name__ == "__main__":
    key = jax.random.PRNGKey(0)
    kx, kparams = jax.random.split(key)

    # small shapes: batch=2, in_channels=4, spatial=16; s3=32, s4=64,
    # head=16, num_classes=256.
    B, CIN, H, W = 2, 4, 16, 16
    S3, S4, HEAD, NCLS = 32, 64, 16, 256

    x = jax.random.normal(kx, (B, CIN, H, W), dtype=jnp.float32)
    params = init_params(kparams, CIN, S3, S4, HEAD, NCLS)

    # Small tiles so every accumulation / tiling path is exercised at toy
    # shapes: spatial (HW3=64 -> 4 tiles, split across 2 'cores'),
    # GeM (HW4=16 -> 2 tiles), classes (NCLS=256 -> 2 tiles).
    fwd = jax.jit(functools.partial(dolg_forward, spatial_tile=16, gem_tile=8,
                                    cls_tile=128, spatial_split=2))
    feat, logits = fwd(x, params)
    jax.block_until_ready((feat, logits))

    ref_feat, ref_logits = reference_forward(x, params)
    assert feat.shape == (B, HEAD) and logits.shape == (B, NCLS)
    assert bool(jnp.all(jnp.isfinite(feat))) and bool(jnp.all(jnp.isfinite(logits)))
    assert jnp.allclose(feat, ref_feat, rtol=1e-2, atol=1e-2), \
        float(jnp.max(jnp.abs(feat - ref_feat)))
    assert jnp.allclose(logits, ref_logits, rtol=1e-2, atol=5e-1), \
        float(jnp.max(jnp.abs(logits - ref_logits)))

    print("KERNEL_OK")
</pallas_src>

<mosaic_0001>
module attributes {stable_mosaic.version = 11 : i64} {
  func.func @_gem_fc_kernel(%arg0: i32, %arg1: i32, %arg2: memref<1x8x64xbf16, #tpu.memory_space<vmem>>, %arg3: memref<64x32xbf16, #tpu.memory_space<vmem>>, %arg4: memref<1x32xf32, #tpu.memory_space<vmem>>, %arg5: memref<1x1x32xf32, #tpu.memory_space<vmem>>, %arg6: memref<1x64xf32, #tpu.memory_space<vmem>>) attributes {dimension_semantics = [#tpu.dimension_semantics<parallel>, #tpu.dimension_semantics<arbitrary>], iteration_bounds = array<i64: 2, 2>, scalar_prefetch = 0 : i64, scratch_operands = 1 : i64, tpu.core_type = #tpu.core_type<tc>, window_params = [{transform_indices = @transform_0, window_bounds = array<i64: 1, 8, 64>}, {pipeline_mode = #tpu.pipeline_mode<synchronous>, transform_indices = @transform_1, window_bounds = array<i64: 64, 32>}, {pipeline_mode = #tpu.pipeline_mode<synchronous>, transform_indices = @transform_2, window_bounds = array<i64: 1, 32>}, {transform_indices = @transform_3, window_bounds = array<i64: 1, 1, 32>}]} {
    %c0_i32 = arith.constant 0 : i32
    %0 = arith.cmpi eq, %arg1, %c0_i32 : i32
    %1 = arith.extui %0 : i1 to i32
    %c0_i32_0 = arith.constant 0 : i32
    %2 = arith.cmpi ne, %1, %c0_i32_0 : i32
    scf.if %2 {
      %cst_9 = arith.constant 0.000000e+00 : f32
      %18 = vector.broadcast %cst_9 : f32 to vector<1x64xf32>
      %c0_10 = arith.constant 0 : index
      %c0_11 = arith.constant 0 : index
      %19 = vector.load %arg6[%c0_10, %c0_11] : memref<1x64xf32, #tpu.memory_space<vmem>>, vector<1x64xf32>
      tpu.vector_store %arg6[%c0_10, %c0_11], %18 {strides = array<i32>} : memref<1x64xf32, #tpu.memory_space<vmem>>, vector<1x64xf32>,
    } else {
    }
    %c0 = arith.constant 0 : index
    %c0_1 = arith.constant 0 : index
    %c0_2 = arith.constant 0 : index
    %3 = vector.load %arg2[%c0, %c0_1, %c0_2] : memref<1x8x64xbf16, #tpu.memory_space<vmem>>, vector<1x8x64xbf16>
    %4 = vector.shape_cast %3 : vector<1x8x64xbf16> to vector<8x64xbf16>
    %5 = arith.extf %4 : vector<8x64xbf16> to vector<8x64xf32>
    %cst = arith.constant 9.99999997E-7 : f32
    %6 = vector.broadcast %cst : f32 to vector<8x64xf32>
    %7 = arith.maximumf %5, %6 : vector<8x64xf32>
    %c0_3 = arith.constant 0 : index
    %c0_4 = arith.constant 0 : index
    %8 = vector.load %arg6[%c0_3, %c0_4] : memref<1x64xf32, #tpu.memory_space<vmem>>, vector<1x64xf32>
    %9 = arith.mulf %7, %7 : vector<8x64xf32>
    %10 = arith.mulf %9, %7 : vector<8x64xf32>
    %cst_5 = arith.constant dense<0.000000e+00> : vector<64xf32>
    %11 = vector.multi_reduction <add>, %10, %cst_5 [0] : vector<8x64xf32> to vector<64xf32>
    %12 = vector.shape_cast %11 : vector<64xf32> to vector<1x64xf32>
    %13 = arith.addf %8, %12 : vector<1x64xf32>
    %c0_6 = arith.constant 0 : index
    %c0_7 = arith.constant 0 : index
    %14 = vector.load %arg6[%c0_6, %c0_7] : memref<1x64xf32, #tpu.memory_space<vmem>>, vector<1x64xf32>
    tpu.vector_store %arg6[%c0_6, %c0_7], %13 {strides = array<i32>} : memref<1x64xf32, #tpu.memory_space<vmem>>, vector<1x64xf32>,
    %c1_i32 = arith.constant 1 : i32
    %15 = arith.cmpi eq, %arg1, %c1_i32 : i32
    %16 = arith.extui %15 : i1 to i32
    %c0_i32_8 = arith.constant 0 : i32
    %17 = arith.cmpi ne, %16, %c0_i32_8 : i32
    scf.if %17 {
      %c0_9 = arith.constant 0 : index
      %c0_10 = arith.constant 0 : index
      %18 = vector.load %arg6[%c0_9, %c0_10] : memref<1x64xf32, #tpu.memory_space<vmem>>, vector<1x64xf32>
      %cst_11 = arith.constant 6.250000e-02 : f32
      %19 = vector.broadcast %cst_11 : f32 to vector<1x64xf32>
      %20 = arith.mulf %18, %19 : vector<1x64xf32>
      %21 = math.log %20 : vector<1x64xf32>
      %cst_12 = arith.constant 0.333333343 : f32
      %22 = vector.broadcast %cst_12 : f32 to vector<1x64xf32>
      %23 = arith.mulf %21, %22 : vector<1x64xf32>
      %24 = math.exp %23 : vector<1x64xf32>
      %25 = arith.truncf %24 : vector<1x64xf32> to vector<1x64xbf16>
      %c0_13 = arith.constant 0 : index
      %c0_14 = arith.constant 0 : index
      %26 = vector.load %arg3[%c0_13, %c0_14] : memref<64x32xbf16, #tpu.memory_space<vmem>>, vector<64x32xbf16>
      %cst_15 = arith.constant dense<0.000000e+00> : vector<1x32xf32>
      %27 = tpu.matmul %25, %26, %cst_15 {dimension_numbers = #tpu.dot_dimension_numbers<[1], [0], [0], [1], [0, 0, 1, 1], [], []>} : vector<1x64xbf16>, vector<64x32xbf16>, vector<1x32xf32> -> vector<1x32xf32>
      %c0_16 = arith.constant 0 : index
      %c0_17 = arith.constant 0 : index
      %28 = vector.load %arg4[%c0_16, %c0_17] : memref<1x32xf32, #tpu.memory_space<vmem>>, vector<1x32xf32>
      %29 = arith.addf %27, %28 : vector<1x32xf32>
      %c0_18 = arith.constant 0 : index
      %c0_19 = arith.constant 0 : index
      %c0_20 = arith.constant 0 : index
      %30 = vector.load %arg5[%c0_18, %c0_19, %c0_20] : memref<1x1x32xf32, #tpu.memory_space<vmem>>, vector<1x1x32xf32>
      %31 = vector.shape_cast %30 : vector<1x1x32xf32> to vector<1x32xf32>
      %32 = vector.shape_cast %29 : vector<1x32xf32> to vector<1x1x32xf32>
      tpu.vector_store %arg5[%c0_18, %c0_19, %c0_20], %32 {strides = array<i32>} : memref<1x1x32xf32, #tpu.memory_space<vmem>>, vector<1x1x32xf32>,
    } else {
    }
    return
  }
  func.func @transform_0(%arg0: i32, %arg1: i32) -> (i32, i32, i32) {
    %c0_i32 = arith.constant 0 : i32
    %c0_i32_0 = arith.constant 0 : i32
    return %arg0, %arg1, %c0_i32 : i32, i32, i32
  }
  func.func @transform_1(%arg0: i32, %arg1: i32) -> (i32, i32) {
    %c0_i32 = arith.constant 0 : i32
    %c0_i32_0 = arith.constant 0 : i32
    %c0_i32_1 = arith.constant 0 : i32
    return %c0_i32, %c0_i32_0 : i32, i32
  }
  func.func @transform_2(%arg0: i32, %arg1: i32) -> (i32, i32) {
    %c0_i32 = arith.constant 0 : i32
    %c0_i32_0 = arith.constant 0 : i32
    %c0_i32_1 = arith.constant 0 : i32
    return %c0_i32, %c0_i32_0 : i32, i32
  }
  func.func @transform_3(%arg0: i32, %arg1: i32) -> (i32, i32, i32) {
    %c0_i32 = arith.constant 0 : i32
    %c0_i32_0 = arith.constant 0 : i32
    %c0_i32_1 = arith.constant 0 : i32
    return %arg0, %c0_i32, %c0_i32_0 : i32, i32, i32
  }
}

module attributes {stable_mosaic.version = 11 : i64} {
  func.func @_local_orth_kernel(%arg0: i32, %arg1: i32, %arg2: i32, %arg3: memref<1x16x32xbf16, #tpu.memory_space<vmem>>, %arg4: memref<32x32xbf16, #tpu.memory_space<vmem>>, %arg5: memref<3x32xf32, #tpu.memory_space<vmem>>, %arg6: memref<1x1x32xf32, #tpu.memory_space<vmem>>, %arg7: memref<1x1x1x32xf32, #tpu.memory_space<vmem>>) attributes {dimension_semantics = [#tpu.dimension_semantics<parallel>, #tpu.dimension_semantics<parallel>, #tpu.dimension_semantics<arbitrary>], iteration_bounds = array<i64: 2, 2, 2>, scalar_prefetch = 0 : i64, scratch_operands = 0 : i64, tpu.core_type = #tpu.core_type<tc>, window_params = [{transform_indices = @transform_0, window_bounds = array<i64: 1, 16, 32>}, {pipeline_mode = #tpu.pipeline_mode<synchronous>, transform_indices = @transform_1, window_bounds = array<i64: 32, 32>}, {pipeline_mode = #tpu.pipeline_mode<synchronous>, transform_indices = @transform_2, window_bounds = array<i64: 3, 32>}, {transform_indices = @transform_3, window_bounds = array<i64: 1, 1, 32>}, {transform_indices = @transform_4, window_bounds = array<i64: 1, 1, 1, 32>}]} {
    %c0_i32 = arith.constant 0 : i32
    %0 = arith.cmpi eq, %arg2, %c0_i32 : i32
    %1 = arith.extui %0 : i1 to i32
    %c0_i32_0 = arith.constant 0 : i32
    %2 = arith.cmpi ne, %1, %c0_i32_0 : i32
    scf.if %2 {
      %cst_24 = arith.constant 0.000000e+00 : f32
      %51 = vector.broadcast %cst_24 : f32 to vector<1x32xf32>
      %c0_25 = arith.constant 0 : index
      %c0_26 = arith.constant 0 : index
      %c0_27 = arith.constant 0 : index
      %c0_28 = arith.constant 0 : index
      %52 = vector.load %arg7[%c0_25, %c0_26, %c0_27, %c0_28] : memref<1x1x1x32xf32, #tpu.memory_space<vmem>>, vector<1x1x1x32xf32>
      %53 = vector.shape_cast %52 : vector<1x1x1x32xf32> to vector<1x32xf32>
      %54 = vector.shape_cast %51 : vector<1x32xf32> to vector<1x1x1x32xf32>
      tpu.vector_store %arg7[%c0_25, %c0_26, %c0_27, %c0_28], %54 {strides = array<i32>} : memref<1x1x1x32xf32, #tpu.memory_space<vmem>>, vector<1x1x1x32xf32>,
    } else {
    }
    %c0 = arith.constant 0 : index
    %c0_1 = arith.constant 0 : index
    %c0_2 = arith.constant 0 : index
    %3 = vector.load %arg3[%c0, %c0_1, %c0_2] : memref<1x16x32xbf16, #tpu.memory_space<vmem>>, vector<1x16x32xbf16>
    %4 = vector.shape_cast %3 : vector<1x16x32xbf16> to vector<16x32xbf16>
    %c0_3 = arith.constant 0 : index
    %c0_4 = arith.constant 0 : index
    %5 = vector.load %arg4[%c0_3, %c0_4] : memref<32x32xbf16, #tpu.memory_space<vmem>>, vector<32x32xbf16>
    %c0_5 = arith.constant 0 : index
    %c0_6 = arith.constant 0 : index
    %6 = vector.load %arg5[%c0_5, %c0_6] : memref<3x32xf32, #tpu.memory_space<vmem>>, vector<3x32xf32>
    %cst = arith.constant dense<0.000000e+00> : vector<16x32xf32>
    %7 = tpu.matmul %4, %5, %cst {dimension_numbers = #tpu.dot_dimension_numbers<[1], [0], [0], [1], [0, 0, 1, 1], [], []>} : vector<16x32xbf16>, vector<32x32xbf16>, vector<16x32xf32> -> vector<16x32xf32>
    %8 = vector.extract_strided_slice %6 {offsets = [0, 0], sizes = [1, 32], strides = [1, 1]} : vector<3x32xf32> to vector<1x32xf32>
    %9 = vector.broadcast %8 : vector<1x32xf32> to vector<16x32xf32>
    %10 = arith.addf %7, %9 : vector<16x32xf32>
    %11 = arith.mulf %10, %10 : vector<16x32xf32>
    %cst_7 = arith.constant dense<0.000000e+00> : vector<16xf32>
    %12 = vector.multi_reduction <add>, %11, %cst_7 [1] : vector<16x32xf32> to vector<16xf32>
    %13 = vector.shape_cast %12 : vector<16xf32> to vector<16x1xf32>
    %cst_8 = arith.constant 1.000000e-24 : f32
    %14 = vector.broadcast %cst_8 : f32 to vector<16x1xf32>
    %15 = arith.maximumf %13, %14 : vector<16x1xf32>
    %16 = math.rsqrt %15 : vector<16x1xf32>
    %17 = vector.broadcast %16 : vector<16x1xf32> to vector<16x32xf32>
    %18 = arith.mulf %10, %17 : vector<16x32xf32>
    %cst_9 = arith.constant 0.000000e+00 : f32
    %19 = vector.broadcast %cst_9 : f32 to vector<16x32xf32>
    %20 = arith.maximumf %10, %19 : vector<16x32xf32>
    %21 = vector.extract_strided_slice %6 {offsets = [1, 0], sizes = [1, 32], strides = [1, 1]} : vector<3x32xf32> to vector<1x32xf32>
    %22 = vector.broadcast %21 : vector<1x32xf32> to vector<16x32xf32>
    %23 = arith.mulf %20, %22 : vector<16x32xf32>
    %cst_10 = arith.constant dense<0.000000e+00> : vector<16xf32>
    %24 = vector.multi_reduction <add>, %23, %cst_10 [1] : vector<16x32xf32> to vector<16xf32>
    %25 = vector.shape_cast %24 : vector<16xf32> to vector<16x1xf32>
    %26 = vector.extract_strided_slice %6 {offsets = [2, 0], sizes = [1, 1], strides = [1, 1]} : vector<3x32xf32> to vector<1x1xf32>
    %27 = vector.broadcast %26 : vector<1x1xf32> to vector<16x1xf32>
    %28 = arith.addf %25, %27 : vector<16x1xf32>
    %cst_11 = arith.constant 2.000000e+01 : f32
    %29 = vector.broadcast %cst_11 : f32 to vector<16x1xf32>
    %30 = arith.cmpf ogt, %28, %29 : vector<16x1xf32>
    %cst_12 = arith.constant 2.000000e+01 : f32
    %31 = vector.broadcast %cst_12 : f32 to vector<16x1xf32>
    %32 = arith.minimumf %28, %31 : vector<16x1xf32>
    %33 = math.exp %32 : vector<16x1xf32>
    %cst_13 = arith.constant 1.000000e+00 : f32
    %34 = vector.broadcast %cst_13 : f32 to vector<16x1xf32>
    %35 = arith.addf %34, %33 : vector<16x1xf32>
    %36 = math.log %35 : vector<16x1xf32>
    %37 = arith.select %30, %28, %36 : vector<16x1xi1>, vector<16x1xf32>
    %38 = vector.broadcast %37 : vector<16x1xf32> to vector<16x32xf32>
    %39 = arith.mulf %38, %18 : vector<16x32xf32>
    %c0_14 = arith.constant 0 : index
    %c0_15 = arith.constant 0 : index
    %c0_16 = arith.constant 0 : index
    %c0_17 = arith.constant 0 : index
    %40 = vector.load %arg7[%c0_14, %c0_15, %c0_16, %c0_17] : memref<1x1x1x32xf32, #tpu.memory_space<vmem>>, vector<1x1x1x32xf32>
    %41 = vector.shape_cast %40 : vector<1x1x1x32xf32> to vector<1x32xf32>
    %cst_18 = arith.constant dense<0.000000e+00> : vector<32xf32>
    %42 = vector.multi_reduction <add>, %39, %cst_18 [0] : vector<16x32xf32> to vector<32xf32>
    %43 = vector.shape_cast %42 : vector<32xf32> to vector<1x32xf32>
    %44 = arith.addf %41, %43 : vector<1x32xf32>
    %c0_19 = arith.constant 0 : index
    %c0_20 = arith.constant 0 : index
    %c0_21 = arith.constant 0 : index
    %c0_22 = arith.constant 0 : index
    %45 = vector.load %arg7[%c0_19, %c0_20, %c0_21, %c0_22] : memref<1x1x1x32xf32, #tpu.memory_space<vmem>>, vector<1x1x1x32xf32>
    %46 = vector.shape_cast %45 : vector<1x1x1x32xf32> to vector<1x32xf32>
    %47 = vector.shape_cast %44 : vector<1x32xf32> to vector<1x1x1x32xf32>
    tpu.vector_store %arg7[%c0_19, %c0_20, %c0_21, %c0_22], %47 {strides = array<i32>} : memref<1x1x1x32xf32, #tpu.memory_space<vmem>>, vector<1x1x1x32xf32>,
    %c1_i32 = arith.constant 1 : i32
    %48 = arith.cmpi eq, %arg2, %c1_i32 : i32
    %49 = arith.extui %48 : i1 to i32
    %c0_i32_23 = arith.constant 0 : i32
    %50 = arith.cmpi ne, %49, %c0_i32_23 : i32
    scf.if %50 {
      %c0_24 = arith.constant 0 : index
      %c0_25 = arith.constant 0 : index
      %c0_26 = arith.constant 0 : index
      %c0_27 = arith.constant 0 : index
      %51 = vector.load %arg7[%c0_24, %c0_25, %c0_26, %c0_27] : memref<1x1x1x32xf32, #tpu.memory_space<vmem>>, vector<1x1x1x32xf32>
      %52 = vector.shape_cast %51 : vector<1x1x1x32xf32> to vector<1x32xf32>
      %c0_28 = arith.constant 0 : index
      %c0_29 = arith.constant 0 : index
      %c0_30 = arith.constant 0 : index
      %53 = vector.load %arg6[%c0_28, %c0_29, %c0_30] : memref<1x1x32xf32, #tpu.memory_space<vmem>>, vector<1x1x32xf32>
      %54 = vector.shape_cast %53 : vector<1x1x32xf32> to vector<1x32xf32>
      %55 = arith.mulf %52, %54 : vector<1x32xf32>
      %cst_31 = arith.constant dense<0.000000e+00> : vector<1xf32>
      %56 = vector.multi_reduction <add>, %55, %cst_31 [1] : vector<1x32xf32> to vector<1xf32>
      %57 = vector.shape_cast %56 : vector<1xf32> to vector<1x1xf32>
      %58 = arith.mulf %54, %54 : vector<1x32xf32>
      %cst_32 = arith.constant dense<0.000000e+00> : vector<1xf32>
      %59 = vector.multi_reduction <add>, %58, %cst_32 [1] : vector<1x32xf32> to vector<1xf32>
      %60 = vector.shape_cast %59 : vector<1xf32> to vector<1x1xf32>
      %cst_33 = arith.constant 9.99999996E-13 : f32
      %61 = vector.broadcast %cst_33 : f32 to vector<1x1xf32>
      %62 = arith.maximumf %60, %61 : vector<1x1xf32>
      %63 = vector.broadcast %62 : vector<1x1xf32> to vector<1x32xf32>
      %64 = arith.divf %54, %63 : vector<1x32xf32>
      %65 = vector.broadcast %57 : vector<1x1xf32> to vector<1x32xf32>
      %66 = arith.mulf %65, %64 : vector<1x32xf32>
      %67 = arith.subf %52, %66 : vector<1x32xf32>
      %cst_34 = arith.constant 1.562500e-02 : f32
      %68 = vector.broadcast %cst_34 : f32 to vector<1x32xf32>
      %69 = arith.mulf %67, %68 : vector<1x32xf32>
      %c0_35 = arith.constant 0 : index
      %c0_36 = arith.constant 0 : index
      %c0_37 = arith.constant 0 : index
      %c0_38 = arith.constant 0 : index
      %70 = vector.load %arg7[%c0_35, %c0_36, %c0_37, %c0_38] : memref<1x1x1x32xf32, #tpu.memory_space<vmem>>, vector<1x1x1x32xf32>
      %71 = vector.shape_cast %70 : vector<1x1x1x32xf32> to vector<1x32xf32>
      %72 = vector.shape_cast %69 : vector<1x32xf32> to vector<1x1x1x32xf32>
      tpu.vector_store %arg7[%c0_35, %c0_36, %c0_37, %c0_38], %72 {strides = array<i32>} : memref<1x1x1x32xf32, #tpu.memory_space<vmem>>, vector<1x1x1x32xf32>,
    } else {
    }
    return
  }
  func.func @transform_0(%arg0: i32, %arg1: i32, %arg2: i32) -> (i32, i32, i32) {
    %c2_i32 = arith.constant 2 : i32
    %0 = arith.muli %arg1, %c2_i32 : i32
    %1 = arith.addi %0, %arg2 : i32
    %c0_i32 = arith.constant 0 : i32
    %c0_i32_0 = arith.constant 0 : i32
    return %arg0, %1, %c0_i32 : i32, i32, i32
  }
  func.func @transform_1(%arg0: i32, %arg1: i32, %arg2: i32) -> (i32, i32) {
    %c0_i32 = arith.constant 0 : i32
    %c0_i32_0 = arith.constant 0 : i32
    %c0_i32_1 = arith.constant 0 : i32
    return %c0_i32, %c0_i32_0 : i32, i32
  }
  func.func @transform_2(%arg0: i32, %arg1: i32, %arg2: i32) -> (i32, i32) {
    %c0_i32 = arith.constant 0 : i32
    %c0_i32_0 = arith.constant 0 : i32
    %c0_i32_1 = arith.constant 0 : i32
    return %c0_i32, %c0_i32_0 : i32, i32
  }
  func.func @transform_3(%arg0: i32, %arg1: i32, %arg2: i32) -> (i32, i32, i32) {
    %c0_i32 = arith.constant 0 : i32
    %c0_i32_0 = arith.constant 0 : i32
    %c0_i32_1 = arith.constant 0 : i32
    return %arg0, %c0_i32, %c0_i32_0 : i32, i32, i32
  }
  func.func @transform_4(%arg0: i32, %arg1: i32, %arg2: i32) -> (i32, i32, i32, i32) {
    %c0_i32 = arith.constant 0 : i32
    %c0_i32_0 = arith.constant 0 : i32
    %c0_i32_1 = arith.constant 0 : i32
    return %arg0, %arg1, %c0_i32, %c0_i32_0 : i32, i32, i32, i32
  }
}

module attributes {stable_mosaic.version = 11 : i64} {
  func.func @_fc_norm_kernel(%arg0: memref<2x32xf32, #tpu.memory_space<vmem>>, %arg1: memref<2x32xf32, #tpu.memory_space<vmem>>, %arg2: memref<32x16xbf16, #tpu.memory_space<vmem>>, %arg3: memref<32x16xbf16, #tpu.memory_space<vmem>>, %arg4: memref<1x16xf32, #tpu.memory_space<vmem>>, %arg5: memref<2x16xf32, #tpu.memory_space<vmem>>, %arg6: memref<2x16xbf16, #tpu.memory_space<vmem>>) attributes {dimension_semantics = [], scalar_prefetch = 0 : i64, scratch_operands = 0 : i64, tpu.core_type = #tpu.core_type<tc>} {
    %c0 = arith.constant 0 : index
    %c0_0 = arith.constant 0 : index
    %0 = vector.load %arg2[%c0, %c0_0] : memref<32x16xbf16, #tpu.memory_space<vmem>>, vector<32x16xbf16>
    %c0_1 = arith.constant 0 : index
    %c0_2 = arith.constant 0 : index
    %1 = vector.load %arg3[%c0_1, %c0_2] : memref<32x16xbf16, #tpu.memory_space<vmem>>, vector<32x16xbf16>
    %c0_3 = arith.constant 0 : index
    %c0_4 = arith.constant 0 : index
    %2 = vector.load %arg0[%c0_3, %c0_4] : memref<2x32xf32, #tpu.memory_space<vmem>>, vector<2x32xf32>
    %3 = arith.truncf %2 : vector<2x32xf32> to vector<2x32xbf16>
    %cst = arith.constant dense<0.000000e+00> : vector<2x16xf32>
    %4 = tpu.matmul %3, %0, %cst {dimension_numbers = #tpu.dot_dimension_numbers<[1], [0], [0], [1], [0, 0, 1, 1], [], []>} : vector<2x32xbf16>, vector<32x16xbf16>, vector<2x16xf32> -> vector<2x16xf32>
    %c0_5 = arith.constant 0 : index
    %c0_6 = arith.constant 0 : index
    %5 = vector.load %arg1[%c0_5, %c0_6] : memref<2x32xf32, #tpu.memory_space<vmem>>, vector<2x32xf32>
    %6 = arith.truncf %5 : vector<2x32xf32> to vector<2x32xbf16>
    %cst_7 = arith.constant dense<0.000000e+00> : vector<2x16xf32>
    %7 = tpu.matmul %6, %1, %cst_7 {dimension_numbers = #tpu.dot_dimension_numbers<[1], [0], [0], [1], [0, 0, 1, 1], [], []>} : vector<2x32xbf16>, vector<32x16xbf16>, vector<2x16xf32> -> vector<2x16xf32>
    %8 = arith.addf %4, %7 : vector<2x16xf32>
    %c0_8 = arith.constant 0 : index
    %c0_9 = arith.constant 0 : index
    %9 = vector.load %arg4[%c0_8, %c0_9] : memref<1x16xf32, #tpu.memory_space<vmem>>, vector<1x16xf32>
    %10 = vector.broadcast %9 : vector<1x16xf32> to vector<2x16xf32>
    %11 = arith.addf %8, %10 : vector<2x16xf32>
    %c0_10 = arith.constant 0 : index
    %c0_11 = arith.constant 0 : index
    %12 = vector.load %arg5[%c0_10, %c0_11] : memref<2x16xf32, #tpu.memory_space<vmem>>, vector<2x16xf32>
    tpu.vector_store %arg5[%c0_10, %c0_11], %11 {strides = array<i32>} : memref<2x16xf32, #tpu.memory_space<vmem>>, vector<2x16xf32>,
    %13 = arith.mulf %11, %11 : vector<2x16xf32>
    %cst_12 = arith.constant dense<0.000000e+00> : vector<2xf32>
    %14 = vector.multi_reduction <add>, %13, %cst_12 [1] : vector<2x16xf32> to vector<2xf32>
    %15 = vector.shape_cast %14 : vector<2xf32> to vector<2x1xf32>
    %cst_13 = arith.constant 1.000000e-24 : f32
    %16 = vector.broadcast %cst_13 : f32 to vector<2x1xf32>
    %17 = arith.maximumf %15, %16 : vector<2x1xf32>
    %18 = math.rsqrt %17 : vector<2x1xf32>
    %19 = vector.broadcast %18 : vector<2x1xf32> to vector<2x16xf32>
    %20 = arith.mulf %11, %19 : vector<2x16xf32>
    %21 = arith.truncf %20 : vector<2x16xf32> to vector<2x16xbf16>
    %c0_14 = arith.constant 0 : index
    %c0_15 = arith.constant 0 : index
    %22 = vector.load %arg6[%c0_14, %c0_15] : memref<2x16xbf16, #tpu.memory_space<vmem>>, vector<2x16xbf16>
    tpu.vector_store %arg6[%c0_14, %c0_15], %21 {strides = array<i32>} : memref<2x16xbf16, #tpu.memory_space<vmem>>, vector<2x16xbf16>,
    return
  }
}

module attributes {stable_mosaic.version = 11 : i64} {
  func.func @_arc_kernel(%arg0: i32, %arg1: memref<2x16xbf16, #tpu.memory_space<vmem>>, %arg2: memref<16x128xbf16, #tpu.memory_space<vmem>>, %arg3: memref<2x128xf32, #tpu.memory_space<vmem>>) attributes {dimension_semantics = [#tpu.dimension_semantics<parallel>], iteration_bounds = array<i64: 2>, scalar_prefetch = 0 : i64, scratch_operands = 0 : i64, tpu.core_type = #tpu.core_type<tc>, window_params = [{pipeline_mode = #tpu.pipeline_mode<synchronous>, transform_indices = @transform_0, window_bounds = array<i64: 2, 16>}, {transform_indices = @transform_1, window_bounds = array<i64: 16, 128>}, {transform_indices = @transform_2, window_bounds = array<i64: 2, 128>}]} {
    %c0 = arith.constant 0 : index
    %c0_0 = arith.constant 0 : index
    %0 = vector.load %arg1[%c0, %c0_0] : memref<2x16xbf16, #tpu.memory_space<vmem>>, vector<2x16xbf16>
    %c0_1 = arith.constant 0 : index
    %c0_2 = arith.constant 0 : index
    %1 = vector.load %arg2[%c0_1, %c0_2] : memref<16x128xbf16, #tpu.memory_space<vmem>>, vector<16x128xbf16>
    %cst = arith.constant dense<0.000000e+00> : vector<2x128xf32>
    %2 = tpu.matmul %0, %1, %cst {dimension_numbers = #tpu.dot_dimension_numbers<[1], [0], [0], [1], [0, 0, 1, 1], [], []>} : vector<2x16xbf16>, vector<16x128xbf16>, vector<2x128xf32> -> vector<2x128xf32>
    %cst_3 = arith.constant -1.000000e+00 : f32
    %cst_4 = arith.constant 1.000000e+00 : f32
    %3 = vector.broadcast %cst_3 : f32 to vector<2x128xf32>
    %4 = arith.maximumf %3, %2 : vector<2x128xf32>
    %5 = vector.broadcast %cst_4 : f32 to vector<2x128xf32>
    %6 = arith.minimumf %5, %4 : vector<2x128xf32>
    %cst_5 = arith.constant 1.280000e+02 : f32
    %7 = vector.broadcast %cst_5 : f32 to vector<2x128xf32>
    %8 = arith.mulf %6, %7 : vector<2x128xf32>
    %c0_6 = arith.constant 0 : index
    %c0_7 = arith.constant 0 : index
    %9 = vector.load %arg3[%c0_6, %c0_7] : memref<2x128xf32, #tpu.memory_space<vmem>>, vector<2x128xf32>
    tpu.vector_store %arg3[%c0_6, %c0_7], %8 {strides = array<i32>} : memref<2x128xf32, #tpu.memory_space<vmem>>, vector<2x128xf32>,
    return
  }
  func.func @transform_0(%arg0: i32) -> (i32, i32) {
    %c0_i32 = arith.constant 0 : i32
    %c0_i32_0 = arith.constant 0 : i32
    %c0_i32_1 = arith.constant 0 : i32
    return %c0_i32, %c0_i32_0 : i32, i32
  }
  func.func @transform_1(%arg0: i32) -> (i32, i32) {
    %c0_i32 = arith.constant 0 : i32
    %c0_i32_0 = arith.constant 0 : i32
    return %c0_i32, %arg0 : i32, i32
  }
  func.func @transform_2(%arg0: i32) -> (i32, i32) {
    %c0_i32 = arith.constant 0 : i32
    %c0_i32_0 = arith.constant 0 : i32
    return %c0_i32, %arg0 : i32, i32
  }
}

</mosaic_0001>

<llo_original>
// kernel: dolg_forward.4
$region0: #{dolg_forward.4}
  #allocation0 [shape = 'u32[]', space=smem, size = 0x4, offset = 0x4, fixed_abs, tag = 'smem constant byte address 0x4 - core index']
  #allocation1 [shape = 'u32[72,128]{1,0:T(1,128)}', space=vmem, size = 0x9000, scoped, tag = 'internal scratch']
  #allocation2 [shape = 'f32[1,64]{1,0:T(1,128)}', space=vmem, size = 0x200, scoped, tag = 'scratch operand']
  %s0 = inlined_call_operand.vmem [shape: bf16[2,16,64], index: 0, kind: input, shape index: {}]
  %s1 = inlined_call_operand.vmem [shape: bf16[64,32], index: 1, kind: input, shape index: {}]
  %s2 = inlined_call_operand.vmem [shape: f32[1,32], index: 2, kind: input, shape index: {}]
  %s3 = inlined_call_operand.vmem [shape: f32[2,1,32], index: 3, kind: output, shape index: {}]
  %s4 = sld [smem:[#allocation0]]
  $region53: #{dolg_forward.4} parent=0
    _
  %s6 = ssub.s32 1, %s4
  %s7 = scalar_select 0, %s6, %s4
  loop: start=0, step=1, limit=6
  $region2: #{dolg_forward.4} parent=0 // loop_pre_header
    _
  $region3: #{dolg_forward.4} parent=0 // loop_header
    %s9 = sphi 0, %s13
    %p10 = scmp.ge.s32.totalorder %s9, 6
    %s16 = sphi 0, %s28
    %s17 = sphi 0, %s24
    %s18 = sphi 0, %s16
    %s19 = sphi 0, %s17
    %s20 = sphi 0, %s18
    %s21 = sphi 0, %s19
    %s33 = sphi 0, %s35
    %s36 = sphi 0, %s33
    %s37 = sphi 0, %s36
    %s53 = sphi 0, %s37
    %s57 = sphi 0, %s57
    %s59 = sphi 0, %s57
    %s60 = sphi 0, %s59
    %s74 = sphi 0, %s60
    %s78 = sphi 0, %s78
    %s80 = sphi 0, %s78
    %s81 = sphi 0, %s80
    %s95 = sphi 0, %s81
    %s101 = sphi 0, %s103
    %s104 = sphi 0, %s101
    %s105 = sphi 0, %s104
    %s121 = sphi 0, %s105
  $region4: #{dolg_forward.4} parent=0 // loop_header_branch
    %12 = sbr.rel (%p10) target = $region8
  $region5: #{dolg_forward.4} parent=0 // loop_body
    %s14 = ssub.s32 %s9, 1
    %s15 = ssub.s32 %s9, 2
    %s22 = sadd.s32 1, %s17
    %p23 = scmp.ge.s32.totalorder %s22, 2
    %s24 = scalar_select %p23, 0, %s22
    %s25 = sadd.s32 1, %s16
    %s26 = scalar_select %p23, %s25, %s16
    %p27 = scmp.ge.s32.totalorder %s26, 2
    %s28 = scalar_select %p27, 0, %s26
    %s29 = ssub.s32 %s16, %s28
    %s30 = ssub.s32 %s17, %s24
    %s31 = sor.u32 %s29, %s30
    %p32 = scmp.eq.s32.totalorder %s31, 0
    %s34 = sadd.s32 %s33, 1
    %s35 = scalar_select %p32, %s33, %s34
    %p38 = pneg %p32
    %p39 = scmp.eq.s32.totalorder %s9, 3
    %p40 = por %p38, %p39
    %p41 = scmp.ne.s32.totalorder %s33, %s36
    %p42 = scmp.eq.s32.totalorder %s9, 0
    %p43 = por %p41, %p42
    %p44 = scmp.ne.s32.totalorder %s33, %s36
    %p45 = scmp.eq.s32.totalorder %s14, 3
    %p46 = por %p44, %p45
    %p47 = scmp.ne.s32.totalorder %s36, %s37
    %p48 = scmp.eq.s32.totalorder %s14, 0
    %p49 = por %p47, %p48
    %p50 = scmp.ne.s32.totalorder %s36, %s37
    %p51 = scmp.eq.s32.totalorder %s15, 3
    %p52 = por %p50, %p51
    %p54 = scmp.ne.s32.totalorder %s37, %s53
    %p55 = scmp.eq.s32.totalorder %s15, 0
    %p56 = por %p54, %p55
    %s58 = sadd.s32 %s57, 1
    %p61 = scmp.eq.s32.totalorder %s9, 3
    %p62 = scmp.ne.s32.totalorder %s57, %s59
    %p63 = scmp.eq.s32.totalorder %s9, 0
    %p64 = por %p62, %p63
    %p65 = scmp.ne.s32.totalorder %s57, %s59
    %p66 = scmp.eq.s32.totalorder %s14, 3
    %p67 = por %p65, %p66
    %p68 = scmp.ne.s32.totalorder %s59, %s60
    %p69 = scmp.eq.s32.totalorder %s14, 0
    %p70 = por %p68, %p69
    %p71 = scmp.ne.s32.totalorder %s59, %s60
    %p72 = scmp.eq.s32.totalorder %s15, 3
    %p73 = por %p71, %p72
    %p75 = scmp.ne.s32.totalorder %s60, %s74
    %p76 = scmp.eq.s32.totalorder %s15, 0
    %p77 = por %p75, %p76
    %s79 = sadd.s32 %s78, 1
    %p82 = scmp.eq.s32.totalorder %s9, 3
    %p83 = scmp.ne.s32.totalorder %s78, %s80
    %p84 = scmp.eq.s32.totalorder %s9, 0
    %p85 = por %p83, %p84
    %p86 = scmp.ne.s32.totalorder %s78, %s80
    %p87 = scmp.eq.s32.totalorder %s14, 3
    %p88 = por %p86, %p87
    %p89 = scmp.ne.s32.totalorder %s80, %s81
    %p90 = scmp.eq.s32.totalorder %s14, 0
    %p91 = por %p89, %p90
    %p92 = scmp.ne.s32.totalorder %s80, %s81
    %p93 = scmp.eq.s32.totalorder %s15, 3
    %p94 = por %p92, %p93
    %p96 = scmp.ne.s32.totalorder %s81, %s95
    %p97 = scmp.eq.s32.totalorder %s15, 0
    %p98 = por %p96, %p97
    %s99 = ssub.s32 %s16, %s28
    %p100 = scmp.eq.s32.totalorder %s99, 0
    %s102 = sadd.s32 %s101, 1
    %s103 = scalar_select %p100, %s101, %s102
    %p106 = pneg %p100
    %p107 = scmp.eq.s32.totalorder %s9, 3
    %p108 = por %p106, %p107
    %p109 = scmp.ne.s32.totalorder %s101, %s104
    %p110 = scmp.eq.s32.totalorder %s9, 0
    %p111 = por %p109, %p110
    %p112 = scmp.ne.s32.totalorder %s101, %s104
    %p113 = scmp.eq.s32.totalorder %s14, 3
    %p114 = por %p112, %p113
    %p115 = scmp.ne.s32.totalorder %s104, %s105
    %p116 = scmp.eq.s32.totalorder %s14, 0
    %p117 = por %p115, %p116
    %p118 = scmp.ne.s32.totalorder %s104, %s105
    %p119 = scmp.eq.s32.totalorder %s15, 3
    %p120 = por %p118, %p119
    %p122 = scmp.ne.s32.totalorder %s105, %s121
    %p123 = scmp.eq.s32.totalorder %s15, 0
    %p124 = por %p122, %p123
    %p125 = scmp.le.s32.totalorder 1, %s9
    %p126 = scmp.lt.s32.totalorder %s9, 5
    %p127 = pnand %p125, %p126
    %p128 = pneg %p127
    // Predicated region
    $region9: #{dolg_forward.4} parent=5 // pred_check
      _
    $region10: #{dolg_forward.4} parent=5 // pred_check_branch
      %130 = sbr.rel (%p127) target = $region12
    $region11: #{dolg_forward.4} parent=5 // pred_region
      %s131 = ssub.s32 %s9, 1
      // Predicated region
      $region13: #{dolg_forward.4} parent=11 // pred_check
        %p132 = pneg %p70
      $region14: #{dolg_forward.4} parent=11 // pred_check_branch
        %134 = sbr.rel (%p132) target = $region16
      $region15: #{dolg_forward.4} parent=11 // pred_region
        _
      $region16: #{dolg_forward.4} parent=11 // pred_fallthru
        _
      // Predicated region
      $region17: #{dolg_forward.4} parent=11 // pred_check
        %p135 = pneg %p91
      $region18: #{dolg_forward.4} parent=11 // pred_check_branch
        %137 = sbr.rel (%p135) target = $region20
      $region19: #{dolg_forward.4} parent=11 // pred_region
        _
      $region20: #{dolg_forward.4} parent=11 // pred_fallthru
        _
    $region12: #{dolg_forward.4} parent=5 // pred_fallthru
      _
    %p138 = scmp.lt.s32.totalorder %s9, 4
    // Predicated region
    $region21: #{dolg_forward.4} parent=5 // pred_check
      %p139 = pneg %p138
    $region22: #{dolg_forward.4} parent=5 // pred_check_branch
      %141 = sbr.rel (%p139) target = $region24
    $region23: #{dolg_forward.4} parent=5 // pred_region
      // Predicated region
      $region25: #{dolg_forward.4} parent=23 // pred_check
        %p142 = pneg %p43
      $region26: #{dolg_forward.4} parent=23 // pred_check_branch
        %144 = sbr.rel (%p142) target = $region28
      $region27: #{dolg_forward.4} parent=23 // pred_region
        %p145 = scmp.lt.s32.totalorder %s16, 1
        %s146 = scalar_select %p145, %s16, 1
        %p147 = scmp.lt.s32.totalorder %s17, 1
        %s148 = scalar_select %p147, %s17, 1
        %s149 = smul.addr %s146, 2
        %s150 = sadd.s32 %s148, %s149
        %s151 = smul.addr %s150, 4
        %s152 = scalar_lea.vmem %s0, %s151
      $region28: #{dolg_forward.4} parent=23 // pred_fallthru
        _
    $region24: #{dolg_forward.4} parent=5 // pred_fallthru
      _
    %p153 = scmp.le.s32.totalorder 1, %s9
    %p154 = scmp.lt.s32.totalorder %s9, 5
    %p155 = pnand %p153, %p154
    %p156 = pneg %p155
    // Predicated region
    $region29: #{dolg_forward.4} parent=5 // pred_check
      _
    $region30: #{dolg_forward.4} parent=5 // pred_check_branch
      %158 = sbr.rel (%p155) target = $region32
    $region31: #{dolg_forward.4} parent=5 // pred_region
      %s159 = ssub.s32 %s9, 1
      %p160 = scmp.lt.s32.totalorder %s18, 1
      %s161 = scalar_select %p160, %s18, 1
      %p162 = scmp.lt.s32.totalorder %s19, 1
      %s163 = scalar_select %p162, %s19, 1
      %s164 = smul.addr %s161, 2
      %s165 = sadd.s32 %s163, %s164
      %s166 = smul.addr %s165, 4
      %s167 = scalar_lea.vmem %s0, %s166
      %p168 = pneg %p49
      %p169 = pneg %p46
      %p170 = pneg %p70
      %p171 = pneg %p67
      %p172 = pneg %p91
      %p173 = pneg %p88
      %p174 = pneg %p117
      %p175 = pneg %p114
      %p176 = scmp.lt.s32.totalorder %s18, 1
      %s177 = scalar_select %p176, %s18, 1
      %s178 = scalar_lea.vmem %s3, %s177
      %p179 = scmp.lt.s32.totalorder %s18, 1
      %s180 = scalar_select %p179, %s18, 1
      %p181 = scmp.lt.s32.totalorder %s19, 1
      %s182 = scalar_select %p181, %s19, 1
      %s183 = smul.addr %s180, 2
      %s184 = sadd.s32 %s182, %s183
      %s185 = smul.addr %s184, 4
      %s186 = scalar_lea.vmem %s0, %s185
      %p187 = scmp.lt.s32.totalorder %s18, 1
      %s188 = scalar_select %p187, %s18, 1
      %s189 = scalar_lea.vmem %s3, %s188
      %p191 = scmp.eq.s32.totalorder %s19, 0
      // Predicated region
      $region33: #{dolg_forward.4} parent=31 // pred_check
        %p192 = pneg %p191
      $region34: #{dolg_forward.4} parent=31 // pred_check_branch
        %194 = sbr.rel (%p192) target = $region36
      $region35: #{dolg_forward.4} parent=31 // pred_region
        %vm195 = vcmask 516096
        %196 = vst.msk [vmem:[#allocation2] sm:$0x1] %vm195, 0.0
      $region36: #{dolg_forward.4} parent=31 // pred_fallthru
        _
      %v197 = vld [vmem:[%s186] sm:$0xf]
      %v198 = vunpack.c.l.bf16 %v197
      %v199 = vmax.f32 %v198, 1e-06
      %v200 = vld [vmem:[#allocation2] sm:$0x1]
      %v201 = vmul.f32 %v199, %v199
      %v202 = vmul.f32 %v201, %v199
      %vm203 = vcmask 523264
      %v204 = vsel %vm203, %v202, 0.0
      %v205 = vrot.slane %v204, 4
      %v206 = vadd.f32 %v204, %v205
      %v207 = vrot.slane %v206, 2
      %v208 = vadd.f32 %v206, %v207
      %v209 = vrot.slane %v208, 1
      %v210 = vadd.f32 %v208, %v209
      %v211 = vadd.f32 %v200, %v210
      %vm212 = vcmask 516096
      %213 = vst.msk [vmem:[#allocation2] sm:$0x1] %vm212, %v211
      %p214 = scmp.eq.s32.totalorder %s19, 1
      // Predicated region
      $region37: #{dolg_forward.4} parent=31 // pred_check
        %p215 = pneg %p214
      $region38: #{dolg_forward.4} parent=31 // pred_check_branch
        %217 = sbr.rel (%p215) target = $region40
      $region39: #{dolg_forward.4} parent=31 // pred_region
        %v218 = vld [vmem:[#allocation2] sm:$0x1]
        %v219 = vmul.f32 %v218, 0.0625
        %v220 = vlog2.pop %v219
        %v221 = vmul.f32 %v220, 0.6931472
        %v222 = vmul.f32 %v221, 0.33333334
        %v223 = vmul.f32 %v222, 1.442695
        %v224 = vpow.pop %v223
        %v225 = vpack.c.bf16 %v224, %v224
        %v226 = vld [vmem:[%s1] sm:$0xf]
        %v227 = vld [vmem:[%s1 + $0x4] sm:$0xf]
        %v228 = vld [vmem:[%s1 + $0x8] sm:$0xf]
        %v229 = vld [vmem:[%s1 + $0xc] sm:$0xf]
        %v230 = vld [vmem:[%s1 + $0x10] sm:$0xf]
        %v231 = vld [vmem:[%s1 + $0x14] sm:$0xf]
        %v232 = vld [vmem:[%s1 + $0x18] sm:$0xf]
        %v233 = vld [vmem:[%s1 + $0x1c] sm:$0xf]
        %v234 = vld [vmem:[%s2] sm:$0x1]
        %v243 = vunpack.c.l.b16 %v226
        %v244 = vunpack.c.l.b16 %v227
        %v245 = vunpack.c.l.b16 %v228
        %v246 = vunpack.c.l.b16 %v229
        %v247 = vunpack.c.l.b16 %v230
        %v248 = vunpack.c.l.b16 %v231
        %v249 = vunpack.c.l.b16 %v232
        %v250 = vunpack.c.l.b16 %v233
        %v251 = vpack.c.b16 %v244, %v243
        %v252 = vpack.c.b16 %v246, %v245
        %v253 = vpack.c.b16 %v248, %v247
        %v254 = vpack.c.b16 %v250, %v249
        %v260 = vsel %vm203, %v225, 0
        %262 = vmatpush.bf16.msra.mxu0 0
        %263 = vmatpush.bf16.msra.mxu0 0
        %264 = vmatpush.bf16.msra.mxu0 0
        %265 = vmatpush.bf16.msra.mxu0 0
        %266 = vmatpush.bf16.msra.mxu0 %v254
        %267 = vmatpush.bf16.msra.mxu0 %v253
        %268 = vmatpush.bf16.msra.mxu0 %v252
        %269 = vmatpush.bf16.msra.mxu0 %v251
        %270 = vmatmul.bf16.gmra.mxu0 %v260
        %v271 = vpop.f32.mrf.mxu0
        %v272 = vadd.f32 %v234, %v271
        %v273 = vpop.f32.mrf.mxu0
        %274 = vdwg.mxu0
        %vm275 = vcmask 253952
        %276 = vst.msk [vmem:[%s189] sm:$0x1] %vm275, %v272
      $region40: #{dolg_forward.4} parent=31 // pred_fallthru
        _
      %p277 = scmp.lt.s32.totalorder %s18, 1
      %s278 = scalar_select %p277, %s18, 1
      %s279 = scalar_lea.vmem %s3, %s278
      // Predicated region
      $region41: #{dolg_forward.4} parent=31 // pred_check
        %p280 = pneg %p114
      $region42: #{dolg_forward.4} parent=31 // pred_check_branch
        %282 = sbr.rel (%p280) target = $region44
      $region43: #{dolg_forward.4} parent=31 // pred_region
        _
      $region44: #{dolg_forward.4} parent=31 // pred_fallthru
        _
    $region32: #{dolg_forward.4} parent=5 // pred_fallthru
      _
    %p283 = scmp.le.s32.totalorder 2, %s9
    // Predicated region
    $region45: #{dolg_forward.4} parent=5 // pred_check
      %p284 = pneg %p283
    $region46: #{dolg_forward.4} parent=5 // pred_check_branch
      %286 = sbr.rel (%p284) target = $region48
    $region47: #{dolg_forward.4} parent=5 // pred_region
      %s287 = ssub.s32 %s9, 2
      // Predicated region
      $region49: #{dolg_forward.4} parent=47 // pred_check
        %p288 = pneg %p120
      $region50: #{dolg_forward.4} parent=47 // pred_check_branch
        %290 = sbr.rel (%p288) target = $region52
      $region51: #{dolg_forward.4} parent=47 // pred_region
        %p291 = scmp.lt.s32.totalorder %s20, 1
        %s292 = scalar_select %p291, %s20, 1
        %s293 = scalar_lea.vmem %s3, %s292
      $region52: #{dolg_forward.4} parent=47 // pred_fallthru
        _
    $region48: #{dolg_forward.4} parent=5 // pred_fallthru
      _
  $region6: #{dolg_forward.4} parent=0 // loop_footer
    %s13 = sadd.s32 1, %s9
  $region7: #{dolg_forward.4} parent=0 // loop_footer_branch
    %8 = sbr.rel target = $region3
  $region8: #{dolg_forward.4} parent=0 // loop_exit
    _

// kernel: dolg_forward.6
$region0: #{dolg_forward.6}
  #allocation0 [shape = 'u32[]', space=smem, size = 0x4, offset = 0x4, fixed_abs, tag = 'smem constant byte address 0x4 - core index']
  #allocation1 [shape = 'u32[72,128]{1,0:T(1,128)}', space=vmem, size = 0x9000, scoped, tag = 'internal scratch']
  %s0 = inlined_call_operand.vmem [shape: f32[2,32], index: 0, kind: input, shape index: {}]
  %s1 = inlined_call_operand.vmem [shape: f32[2,32], index: 1, kind: input, shape index: {}]
  %s2 = inlined_call_operand.vmem [shape: bf16[32,16], index: 2, kind: input, shape index: {}]
  %s3 = inlined_call_operand.vmem [shape: bf16[32,16], index: 3, kind: input, shape index: {}]
  %s4 = inlined_call_operand.vmem [shape: f32[1,16], index: 4, kind: input, shape index: {}]
  %s5 = inlined_call_operand.hbm [shape: f32[2,16], index: 5, kind: output, shape index: {0}]
  %s6 = inlined_call_operand.vmem [shape: bf16[2,16], index: 6, kind: output, shape index: {1}]
  %7 = xla_tuple %s5, %s6
  %s8 = sld [smem:[#allocation0]]
  $region38: #{dolg_forward.6} parent=0
    _
  %s10 = ssub.s32 1, %s8
  %s11 = scalar_select 0, %s10, %s8
  $region1: #{dolg_forward.6} parent=0
    #allocation2 [shape = 'u8[1024]{0}', space=vmem, size = 0x400, scoped, tag = 'output window, operand 0, single buffered']
    #allocation3 [shape = 's32[1]{0}', space=sflag, size = 0x4, scoped, tag = 'scoped memory for dolg_forward.6']
    %12 = vsyncpa [#allocation3], 0
    // Predicated region
    $region2: #{dolg_forward.6} parent=1 // pred_check
      _
    $region3: #{dolg_forward.6} parent=1 // pred_check_branch
      %14 = sbr.rel (0) target = $region5
    $region4: #{dolg_forward.6} parent=1 // pred_region
      _
    $region5: #{dolg_forward.6} parent=1 // pred_fallthru
      _
    // Predicated region
    $region6: #{dolg_forward.6} parent=1 // pred_check
      _
    $region7: #{dolg_forward.6} parent=1 // pred_check_branch
      %16 = sbr.rel (0) target = $region9
    $region8: #{dolg_forward.6} parent=1 // pred_region
      _
    $region9: #{dolg_forward.6} parent=1 // pred_fallthru
      _
    // Predicated region
    $region10: #{dolg_forward.6} parent=1 // pred_check
      _
    $region11: #{dolg_forward.6} parent=1 // pred_check_branch
      %18 = sbr.rel (0) target = $region13
    $region12: #{dolg_forward.6} parent=1 // pred_region
      _
    $region13: #{dolg_forward.6} parent=1 // pred_fallthru
      _
    // Predicated region
    $region14: #{dolg_forward.6} parent=1 // pred_check
      _
    $region15: #{dolg_forward.6} parent=1 // pred_check_branch
      %20 = sbr.rel (0) target = $region17
    $region16: #{dolg_forward.6} parent=1 // pred_region
      _
    $region17: #{dolg_forward.6} parent=1 // pred_fallthru
      _
    // Predicated region
    $region18: #{dolg_forward.6} parent=1 // pred_check
      _
    $region19: #{dolg_forward.6} parent=1 // pred_check_branch
      %22 = sbr.rel (0) target = $region21
    $region20: #{dolg_forward.6} parent=1 // pred_region
      _
    $region21: #{dolg_forward.6} parent=1 // pred_fallthru
      _
    %v24 = vld [vmem:[%s2] sm:$0xf]
    %v25 = vld [vmem:[%s2 + $0x4] sm:$0xf]
    %v26 = vld [vmem:[%s2 + $0x8] sm:$0xf]
    %v27 = vld [vmem:[%s2 + $0xc] sm:$0xf]
    %v28 = vld [vmem:[%s3] sm:$0xf]
    %v29 = vld [vmem:[%s3 + $0x4] sm:$0xf]
    %v30 = vld [vmem:[%s3 + $0x8] sm:$0xf]
    %v31 = vld [vmem:[%s3 + $0xc] sm:$0xf]
    %v32 = vld [vmem:[%s0] sm:$0x3]
    %v33 = vpack.c.bf16 %v32, %v32
    %v34 = vld [vmem:[%s1] sm:$0x3]
    %v35 = vpack.c.bf16 %v34, %v34
    %v40 = vunpack.c.l.b16 %v28
    %v41 = vunpack.c.l.b16 %v29
    %v42 = vunpack.c.l.b16 %v30
    %v43 = vunpack.c.l.b16 %v31
    %v44 = vpack.c.b16 %v41, %v40
    %v45 = vpack.c.b16 %v43, %v42
    %vm48 = vcmask 261120
    %v50 = vsel %vm48, %v35, 0
    %52 = vmatpush.bf16.msra.mxu0 0
    %53 = vmatpush.bf16.msra.mxu0 0
    %54 = vmatpush.bf16.msra.mxu0 0
    %55 = vmatpush.bf16.msra.mxu0 0
    %56 = vmatpush.bf16.msra.mxu0 0
    %57 = vmatpush.bf16.msra.mxu0 0
    %58 = vmatpush.bf16.msra.mxu0 %v45
    %59 = vmatpush.bf16.msra.mxu0 %v44
    %60 = vmatmul.bf16.gmra.mxu0 %v50
    %v61 = vpop.f32.mrf.mxu0
    %v62 = vadd.f32 0.0, %v61
    %v63 = vpop.f32.mrf.mxu0
    %64 = vdwg.mxu0
    %v69 = vunpack.c.l.b16 %v24
    %v70 = vunpack.c.l.b16 %v25
    %v71 = vunpack.c.l.b16 %v26
    %v72 = vunpack.c.l.b16 %v27
    %v73 = vpack.c.b16 %v70, %v69
    %v74 = vpack.c.b16 %v72, %v71
    %v78 = vsel %vm48, %v33, 0
    %80 = vmatpush.bf16.msra.mxu0 0
    %81 = vmatpush.bf16.msra.mxu0 0
    %82 = vmatpush.bf16.msra.mxu0 0
    %83 = vmatpush.bf16.msra.mxu0 0
    %84 = vmatpush.bf16.msra.mxu0 0
    %85 = vmatpush.bf16.msra.mxu0 0
    %86 = vmatpush.bf16.msra.mxu0 %v74
    %87 = vmatpush.bf16.msra.mxu0 %v73
    %88 = vmatmul.bf16.gmra.mxu0 %v78
    %v89 = vpop.f32.mrf.mxu0
    %v90 = vadd.f32 %v62, %v89
    %v91 = vpop.f32.mrf.mxu0
    %92 = vdwg.mxu0
    %v93 = vld [vmem:[%s4] sm:$0x1]
    %v95 = vperm.slane %v93, 0
    %v97 = vadd.f32 %v90, %v95
    %vm98 = vcmask 123904
    %99 = vst.msk [vmem:[#allocation2] sm:$0x3] %vm98, %v97
    %v100 = vmul.f32 %v97, %v97
    %v101 = vsel %vm98, %v100, 0.0
    %102 = vadd.xlane.f32.xlu0 %v101
    %v103 = vpop.xlane.xlu0 %102
    %v104 = vmax.f32 %v103, 1e-24
    %v105 = vrsqrt.pop %v104
    %v106 = vmul.f32 %v105, %v104
    %v107 = vmul.f32 %v106, %v105
    %v108 = vmul.f32 0.5, %v107
    %v109 = vsub.f32 1.5, %v108
    %v110 = vmul.f32 %v105, %v109
    %vm111 = vweird.f32 %v104
    %vm112 = vweird.f32 %v105
    %vm113 = vmor %vm111, %vm112
    %v114 = vsel %vm113, %v105, %v110
    %v115 = vmul.f32 %v97, %v114
    %v116 = vpack.c.bf16 %v115, %v115
    %vm117 = vcmask 122880
    %118 = vst.msk [vmem:[%s6] sm:$0x1] %vm117, %v116
    // Predicated region
    $region22: #{dolg_forward.6} parent=1 // pred_check
      _
    $region23: #{dolg_forward.6} parent=1 // pred_check_branch
      %120 = sbr.rel (0) target = $region25
    $region24: #{dolg_forward.6} parent=1 // pred_region
      %122 = vsyncadd [#allocation3], 0
      %s124 = sshll.u32 [#allocation2], 4
      %s125 = int_to_ptr.vmem [resolvable:$true] %s124
      %s126 = sshll.u32 %s5, 4
      %s127 = int_to_ptr.hbm [resolvable:$true] %s126
      %129 = dma.vmem_to_hbm [thread:$0]  %s125, 32, %s127, [#allocation3]
    $region25: #{dolg_forward.6} parent=1 // pred_fallthru
      _
    // Predicated region
    $region26: #{dolg_forward.6} parent=1 // pred_check
      _
    $region27: #{dolg_forward.6} parent=1 // pred_check_branch
      %131 = sbr.rel (0) target = $region29
    $region28: #{dolg_forward.6} parent=1 // pred_region
      _
    $region29: #{dolg_forward.6} parent=1 // pred_fallthru
      _
    // Predicated region
    $region30: #{dolg_forward.6} parent=1 // pred_check
      _
    $region31: #{dolg_forward.6} parent=1 // pred_check_branch
      %133 = sbr.rel (0) target = $region33
    $region32: #{dolg_forward.6} parent=1 // pred_region
      %135 = dma.done [#allocation3], 32
    $region33: #{dolg_forward.6} parent=1 // pred_fallthru
      _
    // Predicated region
    $region34: #{dolg_forward.6} parent=1 // pred_check
      _
    $region35: #{dolg_forward.6} parent=1 // pred_check_branch
      %137 = sbr.rel (0) target = $region37
    $region36: #{dolg_forward.6} parent=1 // pred_region
      _
    $region37: #{dolg_forward.6} parent=1 // pred_fallthru
      _
    %138 = vsyncpa [#allocation3], 1

// kernel: dolg_forward.5
$region0: #{dolg_forward.5}
  #allocation0 [shape = 'u32[]', space=smem, size = 0x4, offset = 0x4, fixed_abs, tag = 'smem constant byte address 0x4 - core index']
  #allocation1 [shape = 'u32[72,128]{1,0:T(1,128)}', space=vmem, size = 0x9000, scoped, tag = 'internal scratch']
  %s0 = inlined_call_operand.vmem [shape: bf16[2,64,32], index: 0, kind: input, shape index: {}]
  %s1 = inlined_call_operand.vmem [shape: bf16[32,32], index: 1, kind: input, shape index: {}]
  %s2 = inlined_call_operand.vmem [shape: f32[3,32], index: 2, kind: input, shape index: {}]
  %s3 = inlined_call_operand.vmem [shape: f32[2,1,32], index: 3, kind: input, shape index: {}]
  %s4 = inlined_call_operand.vmem [shape: f32[2,2,1,32], index: 4, kind: output, shape index: {}]
  %s5 = sld [smem:[#allocation0]]
  $region57: #{dolg_forward.5} parent=0
    _
  %s7 = ssub.s32 1, %s5
  %s8 = scalar_select 0, %s7, %s5
  loop: start=0, step=1, limit=10
  $region2: #{dolg_forward.5} parent=0 // loop_pre_header
    _
  $region3: #{dolg_forward.5} parent=0 // loop_header
    %s10 = sphi 0, %s14
    %p11 = scmp.ge.s32.totalorder %s10, 10
    %s17 = sphi 0, %s36
    %s18 = sphi 0, %s32
    %s19 = sphi 0, %s28
    %s20 = sphi 0, %s17
    %s21 = sphi 0, %s18
    %s22 = sphi 0, %s19
    %s23 = sphi 0, %s20
    %s24 = sphi 0, %s21
    %s25 = sphi 0, %s22
    %s45 = sphi 0, %s47
    %s48 = sphi 0, %s45
    %s49 = sphi 0, %s48
    %s65 = sphi 0, %s49
    %s69 = sphi 0, %s69
    %s71 = sphi 0, %s69
    %s72 = sphi 0, %s71
    %s86 = sphi 0, %s72
    %s90 = sphi 0, %s90
    %s92 = sphi 0, %s90
    %s93 = sphi 0, %s92
    %s107 = sphi 0, %s93
    %s113 = sphi 0, %s115
    %s116 = sphi 0, %s113
    %s117 = sphi 0, %s116
    %s133 = sphi 0, %s117
    %s141 = sphi 0, %s143
    %s144 = sphi 0, %s141
    %s145 = sphi 0, %s144
    %s161 = sphi 0, %s145
  $region4: #{dolg_forward.5} parent=0 // loop_header_branch
    %13 = sbr.rel (%p11) target = $region8
  $region5: #{dolg_forward.5} parent=0 // loop_body
    %s15 = ssub.s32 %s10, 1
    %s16 = ssub.s32 %s10, 2
    %s26 = sadd.s32 1, %s19
    %p27 = scmp.ge.s32.totalorder %s26, 2
    %s28 = scalar_select %p27, 0, %s26
    %s29 = sadd.s32 1, %s18
    %s30 = scalar_select %p27, %s29, %s18
    %p31 = scmp.ge.s32.totalorder %s30, 2
    %s32 = scalar_select %p31, 0, %s30
    %s33 = sadd.s32 1, %s17
    %s34 = scalar_select %p31, %s33, %s17
    %p35 = scmp.ge.s32.totalorder %s34, 2
    %s36 = scalar_select %p35, 0, %s34
    %s37 = smul.u32 %s18, 2
    %s38 = sadd.s32 %s37, %s19
    %s39 = smul.u32 %s32, 2
    %s40 = sadd.s32 %s39, %s28
    %s41 = ssub.s32 %s17, %s36
    %s42 = ssub.s32 %s38, %s40
    %s43 = sor.u32 %s41, %s42
    %p44 = scmp.eq.s32.totalorder %s43, 0
    %s46 = sadd.s32 %s45, 1
    %s47 = scalar_select %p44, %s45, %s46
    %p50 = pneg %p44
    %p51 = scmp.eq.s32.totalorder %s10, 7
    %p52 = por %p50, %p51
    %p53 = scmp.ne.s32.totalorder %s45, %s48
    %p54 = scmp.eq.s32.totalorder %s10, 0
    %p55 = por %p53, %p54
    %p56 = scmp.ne.s32.totalorder %s45, %s48
    %p57 = scmp.eq.s32.totalorder %s15, 7
    %p58 = por %p56, %p57
    %p59 = scmp.ne.s32.totalorder %s48, %s49
    %p60 = scmp.eq.s32.totalorder %s15, 0
    %p61 = por %p59, %p60
    %p62 = scmp.ne.s32.totalorder %s48, %s49
    %p63 = scmp.eq.s32.totalorder %s16, 7
    %p64 = por %p62, %p63
    %p66 = scmp.ne.s32.totalorder %s49, %s65
    %p67 = scmp.eq.s32.totalorder %s16, 0
    %p68 = por %p66, %p67
    %s70 = sadd.s32 %s69, 1
    %p73 = scmp.eq.s32.totalorder %s10, 7
    %p74 = scmp.ne.s32.totalorder %s69, %s71
    %p75 = scmp.eq.s32.totalorder %s10, 0
    %p76 = por %p74, %p75
    %p77 = scmp.ne.s32.totalorder %s69, %s71
    %p78 = scmp.eq.s32.totalorder %s15, 7
    %p79 = por %p77, %p78
    %p80 = scmp.ne.s32.totalorder %s71, %s72
    %p81 = scmp.eq.s32.totalorder %s15, 0
    %p82 = por %p80, %p81
    %p83 = scmp.ne.s32.totalorder %s71, %s72
    %p84 = scmp.eq.s32.totalorder %s16, 7
    %p85 = por %p83, %p84
    %p87 = scmp.ne.s32.totalorder %s72, %s86
    %p88 = scmp.eq.s32.totalorder %s16, 0
    %p89 = por %p87, %p88
    %s91 = sadd.s32 %s90, 1
    %p94 = scmp.eq.s32.totalorder %s10, 7
    %p95 = scmp.ne.s32.totalorder %s90, %s92
    %p96 = scmp.eq.s32.totalorder %s10, 0
    %p97 = por %p95, %p96
    %p98 = scmp.ne.s32.totalorder %s90, %s92
    %p99 = scmp.eq.s32.totalorder %s15, 7
    %p100 = por %p98, %p99
    %p101 = scmp.ne.s32.totalorder %s92, %s93
    %p102 = scmp.eq.s32.totalorder %s15, 0
    %p103 = por %p101, %p102
    %p104 = scmp.ne.s32.totalorder %s92, %s93
    %p105 = scmp.eq.s32.totalorder %s16, 7
    %p106 = por %p104, %p105
    %p108 = scmp.ne.s32.totalorder %s93, %s107
    %p109 = scmp.eq.s32.totalorder %s16, 0
    %p110 = por %p108, %p109
    %s111 = ssub.s32 %s17, %s36
    %p112 = scmp.eq.s32.totalorder %s111, 0
    %s114 = sadd.s32 %s113, 1
    %s115 = scalar_select %p112, %s113, %s114
    %p118 = pneg %p112
    %p119 = scmp.eq.s32.totalorder %s10, 7
    %p120 = por %p118, %p119
    %p121 = scmp.ne.s32.totalorder %s113, %s116
    %p122 = scmp.eq.s32.totalorder %s10, 0
    %p123 = por %p121, %p122
    %p124 = scmp.ne.s32.totalorder %s113, %s116
    %p125 = scmp.eq.s32.totalorder %s15, 7
    %p126 = por %p124, %p125
    %p127 = scmp.ne.s32.totalorder %s116, %s117
    %p128 = scmp.eq.s32.totalorder %s15, 0
    %p129 = por %p127, %p128
    %p130 = scmp.ne.s32.totalorder %s116, %s117
    %p131 = scmp.eq.s32.totalorder %s16, 7
    %p132 = por %p130, %p131
    %p134 = scmp.ne.s32.totalorder %s117, %s133
    %p135 = scmp.eq.s32.totalorder %s16, 0
    %p136 = por %p134, %p135
    %s137 = ssub.s32 %s17, %s36
    %s138 = ssub.s32 %s18, %s32
    %s139 = sor.u32 %s137, %s138
    %p140 = scmp.eq.s32.totalorder %s139, 0
    %s142 = sadd.s32 %s141, 1
    %s143 = scalar_select %p140, %s141, %s142
    %p146 = pneg %p140
    %p147 = scmp.eq.s32.totalorder %s10, 7
    %p148 = por %p146, %p147
    %p149 = scmp.ne.s32.totalorder %s141, %s144
    %p150 = scmp.eq.s32.totalorder %s10, 0
    %p151 = por %p149, %p150
    %p152 = scmp.ne.s32.totalorder %s141, %s144
    %p153 = scmp.eq.s32.totalorder %s15, 7
    %p154 = por %p152, %p153
    %p155 = scmp.ne.s32.totalorder %s144, %s145
    %p156 = scmp.eq.s32.totalorder %s15, 0
    %p157 = por %p155, %p156
    %p158 = scmp.ne.s32.totalorder %s144, %s145
    %p159 = scmp.eq.s32.totalorder %s16, 7
    %p160 = por %p158, %p159
    %p162 = scmp.ne.s32.totalorder %s145, %s161
    %p163 = scmp.eq.s32.totalorder %s16, 0
    %p164 = por %p162, %p163
    %p165 = scmp.le.s32.totalorder 1, %s10
    %p166 = scmp.lt.s32.totalorder %s10, 9
    %p167 = pnand %p165, %p166
    %p168 = pneg %p167
    // Predicated region
    $region9: #{dolg_forward.5} parent=5 // pred_check
      _
    $region10: #{dolg_forward.5} parent=5 // pred_check_branch
      %170 = sbr.rel (%p167) target = $region12
    $region11: #{dolg_forward.5} parent=5 // pred_region
      %s171 = ssub.s32 %s10, 1
      // Predicated region
      $region13: #{dolg_forward.5} parent=11 // pred_check
        %p172 = pneg %p82
      $region14: #{dolg_forward.5} parent=11 // pred_check_branch
        %174 = sbr.rel (%p172) target = $region16
      $region15: #{dolg_forward.5} parent=11 // pred_region
        _
      $region16: #{dolg_forward.5} parent=11 // pred_fallthru
        _
      // Predicated region
      $region17: #{dolg_forward.5} parent=11 // pred_check
        %p175 = pneg %p103
      $region18: #{dolg_forward.5} parent=11 // pred_check_branch
        %177 = sbr.rel (%p175) target = $region20
      $region19: #{dolg_forward.5} parent=11 // pred_region
        _
      $region20: #{dolg_forward.5} parent=11 // pred_fallthru
        _
    $region12: #{dolg_forward.5} parent=5 // pred_fallthru
      _
    %p178 = scmp.lt.s32.totalorder %s10, 8
    // Predicated region
    $region21: #{dolg_forward.5} parent=5 // pred_check
      %p179 = pneg %p178
    $region22: #{dolg_forward.5} parent=5 // pred_check_branch
      %181 = sbr.rel (%p179) target = $region24
    $region23: #{dolg_forward.5} parent=5 // pred_region
      // Predicated region
      $region25: #{dolg_forward.5} parent=23 // pred_check
        %p182 = pneg %p55
      $region26: #{dolg_forward.5} parent=23 // pred_check_branch
        %184 = sbr.rel (%p182) target = $region28
      $region27: #{dolg_forward.5} parent=23 // pred_region
        %s185 = smul.u32 %s18, 2
        %s186 = sadd.s32 %s185, %s19
        %s187 = smul.u32 2, %s186
        %p188 = scmp.lt.s32.totalorder %s17, 1
        %s189 = scalar_select %p188, %s17, 1
        %p190 = scmp.lt.s32.totalorder %s187, 7
        %s191 = scalar_select %p190, %s187, 7
        %s192 = smul.addr %s189, 8
        %s193 = sadd.s32 %s191, %s192
        %s194 = smul.addr %s193, 4
        %s195 = scalar_lea.vmem %s0, %s194
        %s196 = smul.u32 %s18, 2
        %s197 = sadd.s32 %s196, %s19
        %s198 = smul.u32 2, %s197
      $region28: #{dolg_forward.5} parent=23 // pred_fallthru
        _
      // Predicated region
      $region29: #{dolg_forward.5} parent=23 // pred_check
        %p199 = pneg %p123
      $region30: #{dolg_forward.5} parent=23 // pred_check_branch
        %201 = sbr.rel (%p199) target = $region32
      $region31: #{dolg_forward.5} parent=23 // pred_region
        %p202 = scmp.lt.s32.totalorder %s17, 1
        %s203 = scalar_select %p202, %s17, 1
        %s204 = scalar_lea.vmem %s3, %s203
      $region32: #{dolg_forward.5} parent=23 // pred_fallthru
        _
    $region24: #{dolg_forward.5} parent=5 // pred_fallthru
      _
    %p205 = scmp.le.s32.totalorder 1, %s10
    %p206 = scmp.lt.s32.totalorder %s10, 9
    %p207 = pnand %p205, %p206
    %p208 = pneg %p207
    // Predicated region
    $region33: #{dolg_forward.5} parent=5 // pred_check
      _
    $region34: #{dolg_forward.5} parent=5 // pred_check_branch
      %210 = sbr.rel (%p207) target = $region36
    $region35: #{dolg_forward.5} parent=5 // pred_region
      %s211 = ssub.s32 %s10, 1
      %s212 = smul.u32 %s21, 2
      %s213 = sadd.s32 %s212, %s22
      %s214 = smul.u32 2, %s213
      %p215 = scmp.lt.s32.totalorder %s20, 1
      %s216 = scalar_select %p215, %s20, 1
      %p217 = scmp.lt.s32.totalorder %s214, 7
      %s218 = scalar_select %p217, %s214, 7
      %s219 = smul.addr %s216, 8
      %s220 = sadd.s32 %s218, %s219
      %s221 = smul.addr %s220, 4
      %s222 = scalar_lea.vmem %s0, %s221
      %p223 = pneg %p61
      %p224 = pneg %p58
      %p225 = pneg %p82
      %p226 = pneg %p79
      %p227 = pneg %p103
      %p228 = pneg %p100
      %p229 = scmp.lt.s32.totalorder %s20, 1
      %s230 = scalar_select %p229, %s20, 1
      %s231 = scalar_lea.vmem %s3, %s230
      %p232 = pneg %p129
      %p233 = pneg %p126
      %p234 = pneg %p157
      %p235 = pneg %p154
      %p236 = scmp.lt.s32.totalorder %s20, 1
      %s237 = scalar_select %p236, %s20, 1
      %p238 = scmp.lt.s32.totalorder %s21, 1
      %s239 = scalar_select %p238, %s21, 1
      %s240 = smul.addr %s237, 2
      %s241 = sadd.s32 %s239, %s240
      %s242 = scalar_lea.vmem %s4, %s241
      %s243 = smul.u32 %s21, 2
      %s244 = sadd.s32 %s243, %s22
      %s245 = smul.u32 2, %s244
      %p246 = scmp.lt.s32.totalorder %s20, 1
      %s247 = scalar_select %p246, %s20, 1
      %p248 = scmp.lt.s32.totalorder %s245, 7
      %s249 = scalar_select %p248, %s245, 7
      %s250 = smul.addr %s247, 8
      %s251 = sadd.s32 %s249, %s250
      %s252 = smul.addr %s251, 4
      %s253 = scalar_lea.vmem %s0, %s252
      %s254 = smul.u32 %s21, 2
      %s255 = sadd.s32 %s254, %s22
      %s256 = smul.u32 2, %s255
      %p257 = scmp.lt.s32.totalorder %s20, 1
      %s258 = scalar_select %p257, %s20, 1
      %s259 = scalar_lea.vmem %s3, %s258
      %p260 = scmp.lt.s32.totalorder %s20, 1
      %s261 = scalar_select %p260, %s20, 1
      %p262 = scmp.lt.s32.totalorder %s21, 1
      %s263 = scalar_select %p262, %s21, 1
      %s264 = smul.addr %s261, 2
      %s265 = sadd.s32 %s263, %s264
      %s266 = scalar_lea.vmem %s4, %s265
      %p268 = scmp.eq.s32.totalorder %s22, 0
      // Predicated region
      $region37: #{dolg_forward.5} parent=35 // pred_check
        %p269 = pneg %p268
      $region38: #{dolg_forward.5} parent=35 // pred_check_branch
        %271 = sbr.rel (%p269) target = $region40
      $region39: #{dolg_forward.5} parent=35 // pred_region
        %vm272 = vcmask 253952
        %273 = vst.msk [vmem:[%s266] sm:$0x1] %vm272, 0.0
      $region40: #{dolg_forward.5} parent=35 // pred_fallthru
        _
      %v274 = vld [vmem:[%s253] sm:$0xf]
      %v275 = vld [vmem:[%s253 + $0x4] sm:$0xf]
      %v276 = vld [vmem:[%s1] sm:$0xf]
      %v277 = vld [vmem:[%s1 + $0x4] sm:$0xf]
      %v278 = vld [vmem:[%s1 + $0x8] sm:$0xf]
      %v279 = vld [vmem:[%s1 + $0xc] sm:$0xf]
      %v280 = vld [vmem:[%s2] sm:$0x7]
      %v281 = vperm.slane %v280, 0
      %v284 = vunpack.c.l.b16 %v274
      %v285 = vunpack.c.l.b16 %v275
      %v286 = vpack.c.b16 %v285, %v284
      %v291 = vunpack.c.l.b16 %v276
      %v292 = vunpack.c.l.b16 %v277
      %v293 = vunpack.c.l.b16 %v278
      %v294 = vunpack.c.l.b16 %v279
      %v295 = vpack.c.b16 %v292, %v291
      %v296 = vpack.c.b16 %v294, %v293
      %vm299 = vcmask 261120
      %v301 = vsel %vm299, %v286, 0
      %303 = vmatpush.bf16.msra.mxu0 0
      %304 = vmatpush.bf16.msra.mxu0 0
      %305 = vmatpush.bf16.msra.mxu0 0
      %306 = vmatpush.bf16.msra.mxu0 0
      %307 = vmatpush.bf16.msra.mxu0 0
      %308 = vmatpush.bf16.msra.mxu0 0
      %309 = vmatpush.bf16.msra.mxu0 %v296
      %310 = vmatpush.bf16.msra.mxu0 %v295
      %311 = vmatmul.bf16.gmra.mxu0 %v301
      %v312 = vpop.f32.mrf.mxu0
      %v313 = vadd.f32 %v281, %v312
      %v314 = vpop.f32.mrf.mxu0
      %v315 = vadd.f32 %v281, %v314
      %316 = vdwg.mxu0
      %v317 = vmul.f32 %v313, %v313
      %v318 = vmul.f32 %v315, %v315
      %v319 = vsel %vm299, %v317, 0.0
      %320 = vadd.xlane.f32.xlu0 %v319
      %v321 = vpop.xlane.xlu0 %320
      %v322 = vsel %vm299, %v318, 0.0
      %323 = vadd.xlane.f32.xlu0 %v322
      %v324 = vpop.xlane.xlu0 %323
      %v325 = vmax.f32 %v321, 1e-24
      %v326 = vmax.f32 %v324, 1e-24
      %v327 = vrsqrt.pop %v325
      %v328 = vmul.f32 %v327, %v325
      %v329 = vmul.f32 %v328, %v327
      %v330 = vmul.f32 0.5, %v329
      %v331 = vsub.f32 1.5, %v330
      %v332 = vmul.f32 %v327, %v331
      %vm333 = vweird.f32 %v325
      %vm334 = vweird.f32 %v327
      %vm335 = vmor %vm333, %vm334
      %v336 = vsel %vm335, %v327, %v332
      %v337 = vrsqrt.pop %v326
      %v338 = vmul.f32 %v337, %v326
      %v339 = vmul.f32 %v338, %v337
      %v340 = vmul.f32 0.5, %v339
      %v341 = vsub.f32 1.5, %v340
      %v342 = vmul.f32 %v337, %v341
      %vm343 = vweird.f32 %v326
      %vm344 = vweird.f32 %v337
      %vm345 = vmor %vm343, %vm344
      %v346 = vsel %vm345, %v337, %v342
      %v347 = vmul.f32 %v313, %v336
      %v348 = vmul.f32 %v315, %v346
      %v349 = vmax.f32 %v313, 0.0
      %v350 = vmax.f32 %v315, 0.0
      %v351 = vperm.slane %v280, 1
      %v352 = vmul.f32 %v349, %v351
      %v353 = vmul.f32 %v350, %v351
      %v354 = vsel %vm299, %v352, 0.0
      %355 = vadd.xlane.f32.xlu0 %v354
      %v356 = vpop.xlane.xlu0 %355
      %v357 = vsel %vm299, %v353, 0.0
      %358 = vadd.xlane.f32.xlu0 %v357
      %v359 = vpop.xlane.xlu0 %358
      %v360 = vperm.slane %v280, 2
      %v361 = vadd.f32 %v356, %v360
      %v362 = vadd.f32 %v359, %v360
      %vm363 = vcmp.gt.f32.partialorder %v361, 20.0
      %vm364 = vcmp.gt.f32.partialorder %v362, 20.0
      %v365 = vmin.f32 %v361, 20.0
      %v366 = vmin.f32 %v362, 20.0
      %v367 = vmul.f32 %v365, 1.442695
      %v368 = vpow.pop %v367
      %v369 = vmul.f32 %v366, 1.442695
      %v370 = vpow.pop %v369
      %v371 = vadd.f32 %v368, 1.0
      %v372 = vadd.f32 %v370, 1.0
      %v373 = vlog2.pop %v371
      %v374 = vmul.f32 %v373, 0.6931472
      %v375 = vlog2.pop %v372
      %v376 = vmul.f32 %v375, 0.6931472
      %v377 = vsel %vm363, %v361, %v374
      %v378 = vsel %vm364, %v362, %v376
      %380 = vset.pattern.permute.xlu0 0
      %381 = vperm.xlu0 %380, %v377
      %v382 = vpop.permute.xlu0 %381
      %385 = vset.pattern.permute.xlu0 0
      %386 = vperm.xlu0 %385, %v378
      %v387 = vpop.permute.xlu0 %386
      %v389 = vmul.f32 %v382, %v347
      %v390 = vmul.f32 %v387, %v348
      %v391 = vld [vmem:[%s266] sm:$0x1]
      %v392 = vsel %vm299, %v389, 0.0
      %v393 = vsel %vm299, %v390, 0.0
      %v394 = vadd.f32 %v392, %v393
      %v395 = vrot.slane %v394, 4
      %v396 = vadd.f32 %v394, %v395
      %v397 = vrot.slane %v396, 2
      %v398 = vadd.f32 %v396, %v397
      %v399 = vrot.slane %v398, 1
      %v400 = vadd.f32 %v398, %v399
      %v401 = vadd.f32 %v391, %v400
      %vm402 = vcmask 253952
      %403 = vst.msk [vmem:[%s266] sm:$0x1] %vm402, %v401
      %p404 = scmp.eq.s32.totalorder %s22, 1
      // Predicated region
      $region41: #{dolg_forward.5} parent=35 // pred_check
        %p405 = pneg %p404
      $region42: #{dolg_forward.5} parent=35 // pred_check_branch
        %407 = sbr.rel (%p405) target = $region44
      $region43: #{dolg_forward.5} parent=35 // pred_region
        %v408 = vld [vmem:[%s266] sm:$0x1]
        %v409 = vld [vmem:[%s259] sm:$0x1]
        %v410 = vmul.f32 %v408, %v409
        %v411 = vsel %vm402, %v410, 0.0
        %412 = vadd.xlane.f32.xlu0 %v411
        %v413 = vpop.xlane.xlu0 %412
        %v414 = vmul.f32 %v409, %v409
        %v415 = vsel %vm402, %v414, 0.0
        %416 = vadd.xlane.f32.xlu0 %v415
        %v417 = vpop.xlane.xlu0 %416
        %v418 = vmax.f32 %v417, 1e-12
        %v419 = vrcp.pop %v418
        %v420 = vmul.f32 %v418, %v419
        %v421 = vsub.f32 1.0, %v420
        %v422 = vmul.f32 %v419, %v421
        %v423 = vadd.f32 %v419, %v422
        %vm424 = vweird.f32 %v418
        %vm425 = vweird.f32 %v419
        %vm426 = vmor %vm424, %vm425
        %v427 = vsel %vm426, %v419, %v423
        %v428 = vand.u32 2147483647, %v418
        %vm429 = vcmp.eq.f32.partialorder %v428, 8.507059e+37
        %v430 = vand.u32 %v418, 2147483648
        %v431 = vor.u32 1.1754944e-38, %v430
        %v432 = vsel %vm429, %v431, %v427
        %v433 = vmul.f32 %v409, %v432
        %v434 = vmul.f32 %v413, %v433
        %v435 = vsub.f32 %v408, %v434
        %v436 = vmul.f32 %v435, 0.015625
        %437 = vst.msk [vmem:[%s266] sm:$0x1] %vm402, %v436
      $region44: #{dolg_forward.5} parent=35 // pred_fallthru
        _
      %p438 = scmp.lt.s32.totalorder %s20, 1
      %s439 = scalar_select %p438, %s20, 1
      %p440 = scmp.lt.s32.totalorder %s21, 1
      %s441 = scalar_select %p440, %s21, 1
      %s442 = smul.addr %s439, 2
      %s443 = sadd.s32 %s441, %s442
      %s444 = scalar_lea.vmem %s4, %s443
      // Predicated region
      $region45: #{dolg_forward.5} parent=35 // pred_check
        %p445 = pneg %p154
      $region46: #{dolg_forward.5} parent=35 // pred_check_branch
        %447 = sbr.rel (%p445) target = $region48
      $region47: #{dolg_forward.5} parent=35 // pred_region
        _
      $region48: #{dolg_forward.5} parent=35 // pred_fallthru
        _
    $region36: #{dolg_forward.5} parent=5 // pred_fallthru
      _
    %p448 = scmp.le.s32.totalorder 2, %s10
    // Predicated region
    $region49: #{dolg_forward.5} parent=5 // pred_check
      %p449 = pneg %p448
    $region50: #{dolg_forward.5} parent=5 // pred_check_branch
      %451 = sbr.rel (%p449) target = $region52
    $region51: #{dolg_forward.5} parent=5 // pred_region
      %s452 = ssub.s32 %s10, 2
      // Predicated region
      $region53: #{dolg_forward.5} parent=51 // pred_check
        %p453 = pneg %p160
      $region54: #{dolg_forward.5} parent=51 // pred_check_branch
        %455 = sbr.rel (%p453) target = $region56
      $region55: #{dolg_forward.5} parent=51 // pred_region
        %p456 = scmp.lt.s32.totalorder %s23, 1
        %s457 = scalar_select %p456, %s23, 1
        %p458 = scmp.lt.s32.totalorder %s24, 1
        %s459 = scalar_select %p458, %s24, 1
        %s460 = smul.addr %s457, 2
        %s461 = sadd.s32 %s459, %s460
        %s462 = scalar_lea.vmem %s4, %s461
      $region56: #{dolg_forward.5} parent=51 // pred_fallthru
        _
    $region52: #{dolg_forward.5} parent=5 // pred_fallthru
      _
  $region6: #{dolg_forward.5} parent=0 // loop_footer
    %s14 = sadd.s32 1, %s10
  $region7: #{dolg_forward.5} parent=0 // loop_footer_branch
    %9 = sbr.rel target = $region3
  $region8: #{dolg_forward.5} parent=0 // loop_exit
    _

// kernel: dolg_forward.7
$region0: #{dolg_forward.7}
  #allocation0 [shape = 'u32[]', space=smem, size = 0x4, offset = 0x4, fixed_abs, tag = 'smem constant byte address 0x4 - core index']
  #allocation1 [shape = 'u32[72,128]{1,0:T(1,128)}', space=vmem, size = 0x9000, scoped, tag = 'internal scratch']
  %s0 = inlined_call_operand.vmem [shape: bf16[2,16], index: 0, kind: input, shape index: {}]
  %s1 = inlined_call_operand.vmem [shape: bf16[16,256], index: 1, kind: input, shape index: {}]
  %s2 = inlined_call_operand.hbm [shape: f32[2,256], index: 2, kind: output, shape index: {}]
  %s3 = sld [smem:[#allocation0]]
  $region82: #{dolg_forward.7} parent=0
    _
  %s5 = ssub.s32 1, %s3
  %s6 = scalar_select 0, %s5, %s3
  $region1: #{dolg_forward.7} parent=0
    #allocation2 [shape = 'u8[8192]{0}', space=vmem, size = 0x2000, scoped, tag = 'input window, operand 1']
    #allocation3 [shape = 'u8[2048]{0}', space=vmem, size = 0x800, scoped, tag = 'output window, operand 0']
    #allocation4 [shape = 's32[2]{0}', space=sflag, size = 0x8, scoped, tag = 'scoped memory for dolg_forward.7']
    %7 = vsyncpa [#allocation4], 0
    %s8 = scalar_lea.sflag [#allocation4], 1
    %9 = vsyncpa %s8, 0
    loop: start=0, step=1, limit=4
    $region2: #{dolg_forward.7} parent=1 // loop_pre_header
      _
    $region3: #{dolg_forward.7} parent=1 // loop_header
      %s11 = sphi 0, %s15
      %p12 = scmp.ge.s32.totalorder %s11, 4
      %s19 = sphi 0, %s19
      %s21 = sphi 0, %s19
      %s22 = sphi 0, %s21
      %s36 = sphi 0, %s22
      %s42 = sphi 0, %s44
      %s45 = sphi 0, %s42
      %s46 = sphi 0, %s45
      %s62 = sphi 0, %s46
      %s68 = sphi 0, %s70
      %s71 = sphi 0, %s68
      %s72 = sphi 0, %s71
      %s88 = sphi 0, %s72
    $region4: #{dolg_forward.7} parent=1 // loop_header_branch
      %14 = sbr.rel (%p12) target = $region8
    $region5: #{dolg_forward.7} parent=1 // loop_body
      %s16 = ssub.s32 %s11, 1
      %s17 = ssub.s32 %s11, 2
      %s18 = sadd.s32 %s11, 1
      %s20 = sadd.s32 %s19, 1
      %p23 = scmp.eq.s32.totalorder %s11, 1
      %p24 = scmp.ne.s32.totalorder %s19, %s21
      %p25 = scmp.eq.s32.totalorder %s11, 0
      %p26 = por %p24, %p25
      %p27 = scmp.ne.s32.totalorder %s19, %s21
      %p28 = scmp.eq.s32.totalorder %s16, 1
      %p29 = por %p27, %p28
      %p30 = scmp.ne.s32.totalorder %s21, %s22
      %p31 = scmp.eq.s32.totalorder %s16, 0
      %p32 = por %p30, %p31
      %p33 = scmp.ne.s32.totalorder %s21, %s22
      %p34 = scmp.eq.s32.totalorder %s17, 1
      %p35 = por %p33, %p34
      %p37 = scmp.ne.s32.totalorder %s22, %s36
      %p38 = scmp.eq.s32.totalorder %s17, 0
      %p39 = por %p37, %p38
      %s40 = ssub.s32 %s11, %s18
      %p41 = scmp.eq.s32.totalorder %s40, 0
      %s43 = sadd.s32 %s42, 1
      %s44 = scalar_select %p41, %s42, %s43
      %p47 = pneg %p41
      %p48 = scmp.eq.s32.totalorder %s11, 1
      %p49 = por %p47, %p48
      %p50 = scmp.ne.s32.totalorder %s42, %s45
      %p51 = scmp.eq.s32.totalorder %s11, 0
      %p52 = por %p50, %p51
      %p53 = scmp.ne.s32.totalorder %s42, %s45
      %p54 = scmp.eq.s32.totalorder %s16, 1
      %p55 = por %p53, %p54
      %p56 = scmp.ne.s32.totalorder %s45, %s46
      %p57 = scmp.eq.s32.totalorder %s16, 0
      %p58 = por %p56, %p57
      %p59 = scmp.ne.s32.totalorder %s45, %s46
      %p60 = scmp.eq.s32.totalorder %s17, 1
      %p61 = por %p59, %p60
      %p63 = scmp.ne.s32.totalorder %s46, %s62
      %p64 = scmp.eq.s32.totalorder %s17, 0
      %p65 = por %p63, %p64
      %s66 = ssub.s32 %s11, %s18
      %p67 = scmp.eq.s32.totalorder %s66, 0
      %s69 = sadd.s32 %s68, 1
      %s70 = scalar_select %p67, %s68, %s69
      %p73 = pneg %p67
      %p74 = scmp.eq.s32.totalorder %s11, 1
      %p75 = por %p73, %p74
      %p76 = scmp.ne.s32.totalorder %s68, %s71
      %p77 = scmp.eq.s32.totalorder %s11, 0
      %p78 = por %p76, %p77
      %p79 = scmp.ne.s32.totalorder %s68, %s71
      %p80 = scmp.eq.s32.totalorder %s16, 1
      %p81 = por %p79, %p80
      %p82 = scmp.ne.s32.totalorder %s71, %s72
      %p83 = scmp.eq.s32.totalorder %s16, 0
      %p84 = por %p82, %p83
      %p85 = scmp.ne.s32.totalorder %s71, %s72
      %p86 = scmp.eq.s32.totalorder %s17, 1
      %p87 = por %p85, %p86
      %p89 = scmp.ne.s32.totalorder %s72, %s88
      %p90 = scmp.eq.s32.totalorder %s17, 0
      %p91 = por %p89, %p90
      %p92 = scmp.le.s32.totalorder 1, %s11
      %p93 = scmp.lt.s32.totalorder %s11, 3
      %p94 = pnand %p92, %p93
      %p95 = pneg %p94
      // Predicated region
      $region9: #{dolg_forward.7} parent=5 // pred_check
        _
      $region10: #{dolg_forward.7} parent=5 // pred_check_branch
        %97 = sbr.rel (%p94) target = $region12
      $region11: #{dolg_forward.7} parent=5 // pred_region
        %s98 = ssub.s32 %s11, 1
        // Predicated region
        $region13: #{dolg_forward.7} parent=11 // pred_check
          %p99 = pneg %p32
        $region14: #{dolg_forward.7} parent=11 // pred_check_branch
          %101 = sbr.rel (%p99) target = $region16
        $region15: #{dolg_forward.7} parent=11 // pred_region
          _
        $region16: #{dolg_forward.7} parent=11 // pred_fallthru
          _
      $region12: #{dolg_forward.7} parent=5 // pred_fallthru
        _
      %p102 = scmp.lt.s32.totalorder %s11, 2
      // Predicated region
      $region17: #{dolg_forward.7} parent=5 // pred_check
        %p103 = pneg %p102
      $region18: #{dolg_forward.7} parent=5 // pred_check_branch
        %105 = sbr.rel (%p103) target = $region20
      $region19: #{dolg_forward.7} parent=5 // pred_region
        // Predicated region
        $region21: #{dolg_forward.7} parent=19 // pred_check
          %p106 = pneg %p52
        $region22: #{dolg_forward.7} parent=19 // pred_check_branch
          %108 = sbr.rel (%p106) target = $region24
        $region23: #{dolg_forward.7} parent=19 // pred_region
          %s109 = sand.u32 %s42, 1
          %s110 = sand.u32 %s42, 1
          %s111 = smul.addr %s110, 8
          %s112 = scalar_lea.vmem [#allocation2], %s111
          %s113 = smul.addr %s11, 4
          %s114 = scalar_lea.vmem %s1, %s113
          // Predicated region
          $region25: #{dolg_forward.7} parent=23 // pred_check
            _
          $region26: #{dolg_forward.7} parent=23 // pred_check_branch
            %116 = sbr.rel (0) target = $region28
          $region27: #{dolg_forward.7} parent=23 // pred_region
            // Predicated region
            $region29: #{dolg_forward.7} parent=27 // pred_check
              _
            $region30: #{dolg_forward.7} parent=27 // pred_check_branch
              %118 = sbr.rel target = $region32
            $region31: #{dolg_forward.7} parent=27 // pred_region
              // Predicated region
              $region44: #{dolg_forward.7} parent=31 // pred_check
                _
              $region45: #{dolg_forward.7} parent=31 // pred_check_branch
                %136 = sbr.rel (0) target = $region47
              $region46: #{dolg_forward.7} parent=31 // pred_region
                loop: start=0, step=1, limit=1
                $region48: #{dolg_forward.7} parent=46 // loop_pre_header
                  _
                $region49: #{dolg_forward.7} parent=46 // loop_header
                  %s138 = sphi 0, %s142
                  %p139 = scmp.ge.s32.totalorder %s138, 1
                  %s143 = sphi %s114, %s114
                  %s144 = sphi %s112, %s112
                $region50: #{dolg_forward.7} parent=46 // loop_header_branch
                  %141 = sbr.rel (%p139) target = $region54
                $region51: #{dolg_forward.7} parent=46 // loop_body
                  _
                $region52: #{dolg_forward.7} parent=46 // loop_footer
                  %s142 = sadd.s32 1, %s138
                $region53: #{dolg_forward.7} parent=46 // loop_footer_branch
                  %137 = sbr.rel target = $region49
                $region54: #{dolg_forward.7} parent=46 // loop_exit
                  _
                %s146 = ssub.s32 16, 1
                loop: start=0, step=1, limit=1
                $region55: #{dolg_forward.7} parent=46 // loop_pre_header
                  _
                $region56: #{dolg_forward.7} parent=46 // loop_header
                  %s148 = sphi 0, %s152
                  %p149 = scmp.ge.s32.totalorder %s148, 1
                  %s153 = sphi %s114, %s114
                  %s154 = sphi %s112, %s112
                $region57: #{dolg_forward.7} parent=46 // loop_header_branch
                  %151 = sbr.rel (%p149) target = $region61
                $region58: #{dolg_forward.7} parent=46 // loop_body
                  %v155 = vld [vmem:[%s153] sm:%s146]
                  %156 = vst [vmem:[%s154] sm:%s146] %v155
                  %v157 = vld [vmem:[%s153 + $0x8] sm:%s146]
                  %158 = vst [vmem:[%s154 + $0x4] sm:%s146] %v157
                $region59: #{dolg_forward.7} parent=46 // loop_footer
                  %s152 = sadd.s32 1, %s148
                $region60: #{dolg_forward.7} parent=46 // loop_footer_branch
                  %147 = sbr.rel target = $region56
                $region61: #{dolg_forward.7} parent=46 // loop_exit
                  _
              $region47: #{dolg_forward.7} parent=31 // pred_fallthru
                _
            $region32: #{dolg_forward.7} parent=27 // pred_fallthru
              _
            // Predicated region
            $region33: #{dolg_forward.7} parent=27 // pred_check
              _
            $region34: #{dolg_forward.7} parent=27 // pred_check_branch
              %120 = sbr.rel (0) target = $region36
            $region35: #{dolg_forward.7} parent=27 // pred_region
              %s122 = ssub.s32 16, 1
              loop: start=0, step=1, limit=1
              $region37: #{dolg_forward.7} parent=35 // loop_pre_header
                _
              $region38: #{dolg_forward.7} parent=35 // loop_header
                %s124 = sphi 0, %s128
                %p125 = scmp.ge.s32.totalorder %s124, 1
                %s129 = sphi %s114, %s114
                %s130 = sphi %s112, %s112
              $region39: #{dolg_forward.7} parent=35 // loop_header_branch
                %127 = sbr.rel (%p125) target = $region43
              $region40: #{dolg_forward.7} parent=35 // loop_body
                %v131 = vld [vmem:[%s129] sm:%s122]
                %132 = vst [vmem:[%s130] sm:%s122] %v131
                %v133 = vld [vmem:[%s129 + $0x8] sm:%s122]
                %134 = vst [vmem:[%s130 + $0x4] sm:%s122] %v133
              $region41: #{dolg_forward.7} parent=35 // loop_footer
                %s128 = sadd.s32 1, %s124
              $region42: #{dolg_forward.7} parent=35 // loop_footer_branch
                %123 = sbr.rel target = $region38
              $region43: #{dolg_forward.7} parent=35 // loop_exit
                _
            $region36: #{dolg_forward.7} parent=27 // pred_fallthru
              _
          $region28: #{dolg_forward.7} parent=23 // pred_fallthru
            _
          %159 = vnop
        $region24: #{dolg_forward.7} parent=19 // pred_fallthru
          _
      $region20: #{dolg_forward.7} parent=5 // pred_fallthru
        _
      %p160 = scmp.le.s32.totalorder 1, %s11
      %p161 = scmp.lt.s32.totalorder %s11, 3
      %p162 = pnand %p160, %p161
      %p163 = pneg %p162
      // Predicated region
      $region62: #{dolg_forward.7} parent=5 // pred_check
        _
      $region63: #{dolg_forward.7} parent=5 // pred_check_branch
        %165 = sbr.rel (%p162) target = $region65
      $region64: #{dolg_forward.7} parent=5 // pred_region
        %s166 = ssub.s32 %s11, 1
        %s167 = sand.u32 %s45, 1
        %s168 = sand.u32 %s45, 1
        %s169 = smul.addr %s168, 8
        %s170 = scalar_lea.vmem [#allocation2], %s169
        // Predicated region
        $region66: #{dolg_forward.7} parent=64 // pred_check
          %p171 = pneg %p58
        $region67: #{dolg_forward.7} parent=64 // pred_check_branch
          %173 = sbr.rel (%p171) target = $region69
        $region68: #{dolg_forward.7} parent=64 // pred_region
          _
        $region69: #{dolg_forward.7} parent=64 // pred_fallthru
          _
        %p174 = pneg %p32
        %p175 = pneg %p29
        %s176 = sand.u32 %s45, 1
        %s177 = sand.u32 %s45, 1
        %s178 = smul.addr %s177, 8
        %s179 = scalar_lea.vmem [#allocation2], %s178
        %p180 = pneg %p58
        %p181 = pneg %p55
        %p182 = pneg %p84
        %p183 = pneg %p81
        %s184 = sand.u32 %s71, 1
        %s185 = scalar_lea.sflag [#allocation4], %s184
        %s186 = sand.u32 %s71, 1
        %s187 = smul.addr %s186, 2
        %s188 = scalar_lea.vmem [#allocation3], %s187
        %v190 = vld [vmem:[%s0] sm:$0x1]
        %v191 = vld [vmem:[%s170] sm:$0xf]
        %v192 = vld [vmem:[%s170 + $0x4] sm:$0xf]
        %v195 = vunpack.c.l.b16 %v191
        %v196 = vunpack.c.l.b16 %v192
        %v197 = vpack.c.b16 %v196, %v195
        %vm199 = vcmask 130048
        %v201 = vsel %vm199, %v190, 0
        %203 = vmatpush.bf16.msra.mxu0 0
        %204 = vmatpush.bf16.msra.mxu0 0
        %205 = vmatpush.bf16.msra.mxu0 0
        %206 = vmatpush.bf16.msra.mxu0 0
        %207 = vmatpush.bf16.msra.mxu0 0
        %208 = vmatpush.bf16.msra.mxu0 0
        %209 = vmatpush.bf16.msra.mxu0 0
        %210 = vmatpush.bf16.msra.mxu0 %v197
        %211 = vmatmul.bf16.gmra.mxu0 %v201
        %v212 = vpop.f32.mrf.mxu0
        %v213 = vadd.f32 0.0, %v212
        %v214 = vpop.f32.mrf.mxu0
        %215 = vdwg.mxu0
        %v216 = vmax.f32 %v213, -1.0
        %v217 = vmin.f32 %v216, 1.0
        %v218 = vmul.f32 %v217, 128.0
        %219 = vst [vmem:[%s188] sm:$0x3] %v218
        %s220 = sand.u32 %s71, 1
        %s221 = scalar_lea.sflag [#allocation4], %s220
        %s222 = sand.u32 %s71, 1
        %s223 = smul.addr %s222, 2
        %s224 = scalar_lea.vmem [#allocation3], %s223
        // Predicated region
        $region70: #{dolg_forward.7} parent=64 // pred_check
          %p225 = pneg %p81
        $region71: #{dolg_forward.7} parent=64 // pred_check_branch
          %227 = sbr.rel (%p225) target = $region73
        $region72: #{dolg_forward.7} parent=64 // pred_region
          %229 = vsyncadd %s221, 0
          %s230 = smul.addr %s16, 2
          %s231 = scalar_lea.hbm %s2, %s230
          %s233 = sshll.u32 %s224, 4
          %s234 = int_to_ptr.vmem [resolvable:$true] %s233
          %s235 = sshll.u32 %s231, 4
          %s236 = int_to_ptr.hbm [resolvable:$true] %s235
          %238 = dma.vmem_to_hbm [thread:$0]  %s234, 32, %s236, %s221
        $region73: #{dolg_forward.7} parent=64 // pred_fallthru
          _
      $region65: #{dolg_forward.7} parent=5 // pred_fallthru
        _
      %p239 = scmp.le.s32.totalorder 2, %s11
      // Predicated region
      $region74: #{dolg_forward.7} parent=5 // pred_check
        %p240 = pneg %p239
      $region75: #{dolg_forward.7} parent=5 // pred_check_branch
        %242 = sbr.rel (%p240) target = $region77
      $region76: #{dolg_forward.7} parent=5 // pred_region
        %s243 = ssub.s32 %s11, 2
        // Predicated region
        $region78: #{dolg_forward.7} parent=76 // pred_check
          %p244 = pneg %p87
        $region79: #{dolg_forward.7} parent=76 // pred_check_branch
          %246 = sbr.rel (%p244) target = $region81
        $region80: #{dolg_forward.7} parent=76 // pred_region
          %s247 = sand.u32 %s72, 1
          %s248 = scalar_lea.sflag [#allocation4], %s247
          %s249 = sand.u32 %s72, 1
          %s250 = smul.addr %s249, 2
          %s251 = scalar_lea.vmem [#allocation3], %s250
          %253 = dma.done %s248, 32
        $region81: #{dolg_forward.7} parent=76 // pred_fallthru
          _
      $region77: #{dolg_forward.7} parent=5 // pred_fallthru
        _
    $region6: #{dolg_forward.7} parent=1 // loop_footer
      %s15 = sadd.s32 1, %s11
    $region7: #{dolg_forward.7} parent=1 // loop_footer_branch
      %10 = sbr.rel target = $region3
    $region8: #{dolg_forward.7} parent=1 // loop_exit
      _
    %254 = vsyncpa [#allocation4], 1
    %s255 = scalar_lea.sflag [#allocation4], 1
    %256 = vsyncpa %s255, 1

</llo_original>
